<compile_context>
chip_gen: v7x
topology: tpu7x:2x2x1
jax: 0.10.0
libtpu: 0.0.40
codegen_flags: <defaults>
</compile_context>

<pallas_src>
import functools

import numpy as np
import jax
import jax.numpy as jnp
from jax.experimental import pallas as pl
from jax.experimental.pallas import tpu as pltpu


# ----------------------------------------------------------------------------
# Pallas kernel: one LSTM layer, BOTH directions interleaved in one time loop.
# grid = (time_chunk,); h/c carried in VMEM scratch across chunks.
# ----------------------------------------------------------------------------
def _bilstm_scan_kernel(C, B, H, UNROLL,
                        gxf_ref, gxb_ref,        # (C,B,4H) bf16 each
                        mf_ref, mb_ref,          # (C,B,1)  f32 each (0/1 masks)
                        whh_ref,                 # (2,H,4H) bf16
                        outf_ref, outb_ref,      # (C,B,H)  f32 each
                        h_scr, c_scr):           # VMEM scratch, persist over grid
    tc = pl.program_id(0)

    @pl.when(tc == 0)
    def _():
        h_scr[...] = jnp.zeros_like(h_scr)
        c_scr[...] = jnp.zeros_like(c_scr)

    whh_f = whh_ref[0]                           # (H, 4H) bf16, hoisted
    whh_b = whh_ref[1]
    S3 = 3 * H

    def step(j, carry):
        hf, cf, hb, cb = carry                   # hf/hb bf16, cf/cb f32
        jb = C - 1 - j                           # backward local time in its chunk

        # gates = (x @ W_ih^T + b) [precomputed bf16]  +  h @ W_hh^T
        gates_f = gxf_ref[j].astype(jnp.float32) + jnp.dot(
            hf, whh_f, preferred_element_type=jnp.float32)
        gates_b = gxb_ref[jb].astype(jnp.float32) + jnp.dot(
            hb, whh_b, preferred_element_type=jnp.float32)

        # gate layout [i, f, o | g]: one sigmoid over 3H, one tanh over H.
        sig_f = jax.nn.sigmoid(gates_f[:, :S3])
        g_f = jnp.tanh(gates_f[:, S3:])
        sig_b = jax.nn.sigmoid(gates_b[:, :S3])
        g_b = jnp.tanh(gates_b[:, S3:])

        # PackedSequence masking: rows >= batch_sizes[t] stay at the zero init
        # (masks are 0/1 so multiply == where(active, ., 0)).
        mf = mf_ref[j]                           # (B,1) f32
        mb = mb_ref[jb]

        cf_new = (sig_f[:, H:2 * H] * cf + sig_f[:, :H] * g_f) * mf
        hf_new = (sig_f[:, 2 * H:S3] * jnp.tanh(cf_new)) * mf
        cb_new = (sig_b[:, H:2 * H] * cb + sig_b[:, :H] * g_b) * mb
        hb_new = (sig_b[:, 2 * H:S3] * jnp.tanh(cb_new)) * mb

        outf_ref[j] = hf_new
        outb_ref[jb] = hb_new
        return (hf_new.astype(jnp.bfloat16), cf_new,
                hb_new.astype(jnp.bfloat16), cb_new)

    carry0 = (h_scr[0], c_scr[0], h_scr[1], c_scr[1])
    hf, cf, hb, cb = jax.lax.fori_loop(0, C, step, carry0, unroll=UNROLL)
    h_scr[0] = hf
    h_scr[1] = hb
    c_scr[0] = cf
    c_scr[1] = cb


def bilstm_scan(gx_bf16, whh_bf16, step_mask, hidden_size, time_chunk):
    """Recurrent part of one layer, both directions interleaved.

    gx_bf16   : (2, T_pad, B, 4H) bf16  precomputed x@W_ih^T + bias, per direction
    whh_bf16  : (2, H, 4H)        bf16  recurrent weights, per direction
    step_mask : (T_pad, B, 1)     f32   0/1 active-row mask per time step
    returns   : ((T_pad,B,H) f32 forward outputs, (T_pad,B,H) f32 backward outputs)
    """
    _, T_pad, B, G = gx_bf16.shape
    H = hidden_size
    C = time_chunk
    TC = T_pad // C
    UNROLL = max(1, min(8, C))

    kernel = functools.partial(_bilstm_scan_kernel, C, B, H, UNROLL)

    # Forward chain visits time chunks 0..TC-1; backward chain visits TC-1..0.
    fwd_gx_map = lambda tc: (0, tc, 0, 0)
    bwd_gx_map = lambda tc: (1, TC - 1 - tc, 0, 0)
    fwd_map = lambda tc: (tc, 0, 0)
    bwd_map = lambda tc: (TC - 1 - tc, 0, 0)
    w_map = lambda tc: (0, 0, 0)

    # VMEM budget: double-buffered blocks + weights + scratch.  Raise the
    # scoped limit only when actually needed (v5e default is ~16 MiB; keep
    # headroom for v7x's 64 MiB physical VMEM).
    block_bytes = (2 * (2 * C * B * G * 2)      # gx fwd/bwd, bf16, double-buffered
                   + 2 * (2 * C * B * 1 * 4)    # masks
                   + 2 * (2 * C * B * H * 4)    # outputs, f32
                   + 2 * (2 * H * G * 2)        # weights
                   + 2 * B * H * (2 + 4))       # h/c scratch
    vmem_limit = None
    if block_bytes > 12 * 1024 * 1024:
        vmem_limit = min(int(block_bytes * 2), 100 * 1024 * 1024)

    flops = 2 * T_pad * B * (2 * H * G + 16 * H)
    transcendentals = 2 * T_pad * B * 5 * H
    bytes_accessed = (gx_bf16.size * 2 + whh_bf16.size * 2 * TC
                      + 2 * T_pad * B * H * 4 + 2 * step_mask.size * 4)

    outf, outb = pl.pallas_call(
        kernel,
        out_shape=(jax.ShapeDtypeStruct((T_pad, B, H), jnp.float32),
                   jax.ShapeDtypeStruct((T_pad, B, H), jnp.float32)),
        grid_spec=pltpu.PrefetchScalarGridSpec(
            num_scalar_prefetch=0,
            grid=(TC,),
            in_specs=[
                pl.BlockSpec((None, C, B, G), fwd_gx_map),   # gx, forward chunks
                pl.BlockSpec((None, C, B, G), bwd_gx_map),   # gx, backward chunks
                pl.BlockSpec((C, B, 1), fwd_map),            # mask, forward chunks
                pl.BlockSpec((C, B, 1), bwd_map),            # mask, backward chunks
                pl.BlockSpec((2, H, G), w_map),              # W_hh^T (bf16)
            ],
            out_specs=[
                pl.BlockSpec((C, B, H), fwd_map),
                pl.BlockSpec((C, B, H), bwd_map),
            ],
            scratch_shapes=[
                pltpu.VMEM((2, B, H), jnp.bfloat16),   # h carry (fwd, bwd)
                pltpu.VMEM((2, B, H), jnp.float32),    # c carry (fwd, bwd)
            ],
        ),
        compiler_params=pltpu.CompilerParams(
            dimension_semantics=("arbitrary",),       # sequential recurrence
            vmem_limit_bytes=vmem_limit),
        cost_estimate=pl.CostEstimate(flops=flops,
                                      transcendentals=transcendentals,
                                      bytes_accessed=bytes_accessed),
    )(gx_bf16, gx_bf16, step_mask, step_mask, whh_bf16)
    return outf, outb


# ----------------------------------------------------------------------------
# Hoisted input projection: one big bf16 gemm over all (dir, time, batch) rows.
# For layers > 0 the concat(f_out, b_out) is folded into the gemm via a split
# weight einsum, so the concatenated feature tensor is never materialized.
# Result is stored in bf16 (halves HBM traffic of the dominant tensor).
# ----------------------------------------------------------------------------
def input_gates(x_in, w_ih_t, bias, H):
    w = w_ih_t.astype(jnp.bfloat16)
    if x_in.ndim == 3:                       # first layer: (T, B, F)
        g = jnp.einsum('tbf,efg->etbg', x_in.astype(jnp.bfloat16), w,
                       preferred_element_type=jnp.float32)
    else:                                    # deeper layers: (2, T, B, H) stacked dirs
        w = w.reshape(2, 2, H, w.shape[-1])  # (e=this dir, d=prev dir, H, 4H)
        g = jnp.einsum('dtbh,edhg->etbg', x_in.astype(jnp.bfloat16), w,
                       preferred_element_type=jnp.float32)
    g = g + bias.astype(jnp.float32)[:, None, None, :]
    return g.astype(jnp.bfloat16)            # (2, T, B, 4H) bf16


# ----------------------------------------------------------------------------
# Parameter setup: orthogonal init + spectral normalization, mirroring
# reset_parameters() and the double spectral_norm wrapping.
# Gate column order is [i, f, o, g]; to load PyTorch LSTMCell weights
# ([i, f, g, o] row blocks), permute the gate blocks accordingly.
# ----------------------------------------------------------------------------
def orthogonal_init(key, shape):
    r, c = shape
    a = jax.random.normal(key, (max(r, c), min(r, c)), jnp.float32)
    q, rmat = jnp.linalg.qr(a)
    q = q * jnp.sign(jnp.diagonal(rmat))
    if r < c:
        q = q.T
    return q[:r, :c].astype(jnp.float32)


def spectral_normalize(w, iters=50, eps=1e-12):
    # weight / sigma_max via deterministic power iteration (converged form of
    # torch.nn.utils.spectral_norm; torch does 1 iter/forward from a random u).
    u = jnp.ones((w.shape[0],), jnp.float32)
    u = u / (jnp.linalg.norm(u) + eps)
    for _ in range(iters):
        v = w.T @ u
        v = v / (jnp.linalg.norm(v) + eps)
        u = w @ v
        u = u / (jnp.linalg.norm(u) + eps)
    sigma = u @ (w @ v)
    return w / sigma


def init_bilstm_params(key, input_size, hidden_size, num_layers):
    params = []
    f_in = input_size
    for _ in range(num_layers):
        wih_l, whh_l, b_l = [], [], []
        for _d in range(2):                       # 0 = forward cell, 1 = backward cell
            key, k1, k2 = jax.random.split(key, 3)
            w_ih = spectral_normalize(orthogonal_init(k1, (4 * hidden_size, f_in)))
            w_hh = spectral_normalize(orthogonal_init(k2, (4 * hidden_size, hidden_size)))
            wih_l.append(w_ih.T)                                       # (F, 4H)
            whh_l.append(w_hh.T)                                       # (H, 4H)
            b_l.append(jnp.zeros((4 * hidden_size,), jnp.float32))     # b_ih + b_hh = 0
        params.append(dict(w_ih_t=jnp.stack(wih_l),     # (2, F, 4H)
                           w_hh_t=jnp.stack(whh_l),     # (2, H, 4H)
                           bias=jnp.stack(b_l)))        # (2, 4H)
        f_in = 2 * hidden_size
    return params


# ----------------------------------------------------------------------------
# Packed <-> padded glue (single vectorized gather each way).
# ----------------------------------------------------------------------------
def packed_to_padded(data, batch_sizes_np, B):
    T = len(batch_sizes_np)
    F = data.shape[-1]
    offsets = np.concatenate([[0], np.cumsum(batch_sizes_np[:-1])]).astype(np.int64)
    b_idx = np.arange(B, dtype=np.int64)[None, :]
    valid = b_idx < batch_sizes_np[:, None].astype(np.int64)          # (T, B)
    src = np.where(valid, offsets[:, None] + b_idx, 0).astype(np.int32)
    gathered = jnp.take(data, jnp.asarray(src.reshape(-1)), axis=0).reshape(T, B, F)
    return jnp.where(jnp.asarray(valid)[..., None], gathered, 0.0)


def padded_to_packed(padded, batch_sizes_np):
    T, B = padded.shape[0], padded.shape[1]
    t_of = np.repeat(np.arange(T), batch_sizes_np)
    b_of = np.concatenate([np.arange(int(b)) for b in batch_sizes_np])
    flat_idx = (t_of * B + b_of).astype(np.int32)
    return jnp.take(padded.reshape(T * B, -1), jnp.asarray(flat_idx), axis=0)


# ----------------------------------------------------------------------------
# Full BiLSTMM forward (eval mode).
# ----------------------------------------------------------------------------
def bilstm_forward(packed_data, batch_sizes_np, params, hidden_size, time_chunk=32):
    batch_sizes_np = np.asarray(batch_sizes_np, dtype=np.int32)
    assert np.all(np.diff(batch_sizes_np) <= 0), "batch_sizes must be non-increasing"
    B = int(batch_sizes_np[0])
    T = int(len(batch_sizes_np))
    C = int(min(time_chunk, T))
    TC = -(-T // C)
    T_pad = TC * C

    bs_pad = np.zeros((T_pad,), np.int32)
    bs_pad[:T] = batch_sizes_np
    # Per-step 0/1 active-row masks, precomputed off the serial chain.
    step_mask_np = (np.arange(B)[None, :] < bs_pad[:, None]).astype(np.float32)
    step_mask = jnp.asarray(step_mask_np[:, :, None])                  # (T_pad, B, 1)

    x_pad = packed_to_padded(packed_data, batch_sizes_np, B)           # (T, B, F)
    if T_pad > T:
        x_pad = jnp.pad(x_pad, ((0, T_pad - T), (0, 0), (0, 0)))

    x_in = x_pad
    outf = outb = None
    for lp in params:
        gx = input_gates(x_in, lp["w_ih_t"], lp["bias"], hidden_size)  # (2,T_pad,B,4H) bf16
        outf, outb = bilstm_scan(gx, lp["w_hh_t"].astype(jnp.bfloat16),
                                 step_mask, hidden_size, C)            # 2 x (T_pad,B,H) f32
        x_in = jnp.stack([outf, outb])                                 # feeds next layer gemm

    out = jnp.concatenate([outf[:T], outb[:T]], axis=-1)               # (T, B, 2H)
    packed_out = padded_to_packed(out, batch_sizes_np)

    masks = {"outer": [], "forw": [None] * len(params), "back": [None] * len(params)}
    return (packed_out, jnp.asarray(batch_sizes_np)), masks


# ----------------------------------------------------------------------------
# Pure-JAX reference (same bf16-gx / bf16-matmul / f32-accumulate numerics).
# ----------------------------------------------------------------------------
def _lstm_scan_ref(gx, w_hh_t, batch_sizes_np, H, reverse):
    T, B, _ = gx.shape
    whh = w_hh_t.astype(jnp.bfloat16)
    h = jnp.zeros((B, H), jnp.float32)
    c = jnp.zeros((B, H), jnp.float32)
    out = [None] * T
    steps = range(T - 1, -1, -1) if reverse else range(T)
    for t in steps:
        bs = int(batch_sizes_np[t])
        gates = gx[t].astype(jnp.float32) + jnp.dot(
            h.astype(jnp.bfloat16), whh, preferred_element_type=jnp.float32)
        i = jax.nn.sigmoid(gates[:, :H])
        f = jax.nn.sigmoid(gates[:, H:2 * H])
        o = jax.nn.sigmoid(gates[:, 2 * H:3 * H])
        g = jnp.tanh(gates[:, 3 * H:])
        c_new = f * c + i * g
        h_new = o * jnp.tanh(c_new)
        mask = (np.arange(B) < bs)[:, None]
        h = jnp.where(mask, h_new, 0.0)
        c = jnp.where(mask, c_new, 0.0)
        out[t] = h
    return jnp.stack(out, 0)


def bilstm_forward_ref(packed_data, batch_sizes_np, params, hidden_size):
    B = int(batch_sizes_np[0])
    x_pad = packed_to_padded(packed_data, batch_sizes_np, B)
    x_in = x_pad
    f_out = b_out = None
    for lp in params:
        gx = input_gates(x_in, lp["w_ih_t"], lp["bias"], hidden_size)  # (2,T,B,4H) bf16
        f_out = _lstm_scan_ref(gx[0], lp["w_hh_t"][0], batch_sizes_np,
                               hidden_size, False)
        b_out = _lstm_scan_ref(gx[1], lp["w_hh_t"][1], batch_sizes_np,
                               hidden_size, True)
        x_in = jnp.stack([f_out, b_out])
    out = jnp.concatenate([f_out, b_out], axis=-1)
    return padded_to_packed(out, batch_sizes_np)


# ----------------------------------------------------------------------------
if __name__ == "__main__":
    key = jax.random.PRNGKey(0)
    input_size, hidden_size, num_layers = 16, 32, 2

    # Packed sequence: T=10 steps, max batch 8, non-increasing batch sizes.
    batch_sizes_np = np.array([8, 8, 7, 6, 5, 4, 2, 2, 1, 1], dtype=np.int32)
    total = int(batch_sizes_np.sum())  # 44

    key, kx, kp = jax.random.split(key, 3)
    packed_data = jax.random.normal(kx, (total, input_size), jnp.float32)
    params = init_bilstm_params(kp, input_size, hidden_size, num_layers)

    ref_packed = bilstm_forward_ref(packed_data, batch_sizes_np, params, hidden_size)

    # time_chunk=4 -> grid of 3 chunks with 2 padded steps: exercises the
    # interleaved-direction kernel, the cross-chunk h/c carry, and padding.
    (out_packed, bs_out), masks = bilstm_forward(
        packed_data, batch_sizes_np, params, hidden_size, time_chunk=4)
    out_packed = jax.block_until_ready(out_packed)
    assert out_packed.shape == (total, 2 * hidden_size), out_packed.shape
    np.testing.assert_allclose(np.asarray(out_packed), np.asarray(ref_packed),
                               rtol=5e-3, atol=5e-3)

    # Default (large) time_chunk: single chunk covers the whole sequence.
    (out_packed2, _), _ = bilstm_forward(
        packed_data, batch_sizes_np, params, hidden_size)
    out_packed2 = jax.block_until_ready(out_packed2)
    np.testing.assert_allclose(np.asarray(out_packed2), np.asarray(ref_packed),
                               rtol=5e-3, atol=5e-3)

    print("KERNEL_OK")
</pallas_src>

<mosaic_0001>
module attributes {stable_mosaic.version = 11 : i64} {
  func.func @_bilstm_scan_kernel(%arg0: i32, %arg1: memref<1x4x8x128xbf16, #tpu.memory_space<vmem>>, %arg2: memref<1x4x8x128xbf16, #tpu.memory_space<vmem>>, %arg3: memref<4x8x1xf32, #tpu.memory_space<vmem>>, %arg4: memref<4x8x1xf32, #tpu.memory_space<vmem>>, %arg5: memref<2x32x128xbf16, #tpu.memory_space<vmem>>, %arg6: memref<4x8x32xf32, #tpu.memory_space<vmem>>, %arg7: memref<4x8x32xf32, #tpu.memory_space<vmem>>, %arg8: memref<2x8x32xbf16, #tpu.memory_space<vmem>>, %arg9: memref<2x8x32xf32, #tpu.memory_space<vmem>>) attributes {dimension_semantics = [#tpu.dimension_semantics<arbitrary>], iteration_bounds = array<i64: 3>, scalar_prefetch = 0 : i64, scratch_operands = 2 : i64, tpu.core_type = #tpu.core_type<tc>, window_params = [{transform_indices = @transform_0, window_bounds = array<i64: 1, 4, 8, 128>}, {transform_indices = @transform_1, window_bounds = array<i64: 1, 4, 8, 128>}, {transform_indices = @transform_2, window_bounds = array<i64: 4, 8, 1>}, {transform_indices = @transform_3, window_bounds = array<i64: 4, 8, 1>}, {pipeline_mode = #tpu.pipeline_mode<synchronous>, transform_indices = @transform_4, window_bounds = array<i64: 2, 32, 128>}, {transform_indices = @transform_5, window_bounds = array<i64: 4, 8, 32>}, {transform_indices = @transform_6, window_bounds = array<i64: 4, 8, 32>}]} {
    %c0_i32 = arith.constant 0 : i32
    %0 = arith.cmpi eq, %arg0, %c0_i32 : i32
    %1 = arith.extui %0 : i1 to i32
    %c0_i32_0 = arith.constant 0 : i32
    %2 = arith.cmpi ne, %1, %c0_i32_0 : i32
    scf.if %2 {
      %cst_105 = arith.constant 0.000000e+00 : bf16
      %303 = vector.broadcast %cst_105 : bf16 to vector<2x8x32xbf16>
      %c0_106 = arith.constant 0 : index
      %c0_107 = arith.constant 0 : index
      %c0_108 = arith.constant 0 : index
      %304 = vector.load %arg8[%c0_106, %c0_107, %c0_108] : memref<2x8x32xbf16, #tpu.memory_space<vmem>>, vector<2x8x32xbf16>
      tpu.vector_store %arg8[%c0_106, %c0_107, %c0_108], %303 {strides = array<i32>} : memref<2x8x32xbf16, #tpu.memory_space<vmem>>, vector<2x8x32xbf16>,
      %cst_109 = arith.constant 0.000000e+00 : f32
      %305 = vector.broadcast %cst_109 : f32 to vector<2x8x32xf32>
      %c0_110 = arith.constant 0 : index
      %c0_111 = arith.constant 0 : index
      %c0_112 = arith.constant 0 : index
      %306 = vector.load %arg9[%c0_110, %c0_111, %c0_112] : memref<2x8x32xf32, #tpu.memory_space<vmem>>, vector<2x8x32xf32>
      tpu.vector_store %arg9[%c0_110, %c0_111, %c0_112], %305 {strides = array<i32>} : memref<2x8x32xf32, #tpu.memory_space<vmem>>, vector<2x8x32xf32>,
    } else {
    }
    %c0 = arith.constant 0 : index
    %c0_1 = arith.constant 0 : index
    %c0_2 = arith.constant 0 : index
    %3 = vector.load %arg5[%c0, %c0_1, %c0_2] : memref<2x32x128xbf16, #tpu.memory_space<vmem>>, vector<1x32x128xbf16>
    %4 = vector.shape_cast %3 : vector<1x32x128xbf16> to vector<32x128xbf16>
    %c1 = arith.constant 1 : index
    %c0_3 = arith.constant 0 : index
    %c0_4 = arith.constant 0 : index
    %5 = vector.load %arg5[%c1, %c0_3, %c0_4] : memref<2x32x128xbf16, #tpu.memory_space<vmem>>, vector<1x32x128xbf16>
    %6 = vector.shape_cast %5 : vector<1x32x128xbf16> to vector<32x128xbf16>
    %c0_5 = arith.constant 0 : index
    %c0_6 = arith.constant 0 : index
    %c0_7 = arith.constant 0 : index
    %7 = vector.load %arg8[%c0_5, %c0_6, %c0_7] : memref<2x8x32xbf16, #tpu.memory_space<vmem>>, vector<1x8x32xbf16>
    %8 = vector.shape_cast %7 : vector<1x8x32xbf16> to vector<8x32xbf16>
    %c0_8 = arith.constant 0 : index
    %c0_9 = arith.constant 0 : index
    %c0_10 = arith.constant 0 : index
    %9 = vector.load %arg9[%c0_8, %c0_9, %c0_10] : memref<2x8x32xf32, #tpu.memory_space<vmem>>, vector<1x8x32xf32>
    %10 = vector.shape_cast %9 : vector<1x8x32xf32> to vector<8x32xf32>
    %c1_11 = arith.constant 1 : index
    %c0_12 = arith.constant 0 : index
    %c0_13 = arith.constant 0 : index
    %11 = vector.load %arg8[%c1_11, %c0_12, %c0_13] : memref<2x8x32xbf16, #tpu.memory_space<vmem>>, vector<1x8x32xbf16>
    %12 = vector.shape_cast %11 : vector<1x8x32xbf16> to vector<8x32xbf16>
    %c1_14 = arith.constant 1 : index
    %c0_15 = arith.constant 0 : index
    %c0_16 = arith.constant 0 : index
    %13 = vector.load %arg9[%c1_14, %c0_15, %c0_16] : memref<2x8x32xf32, #tpu.memory_space<vmem>>, vector<1x8x32xf32>
    %14 = vector.shape_cast %13 : vector<1x8x32xf32> to vector<8x32xf32>
    %c0_i32_17 = arith.constant 0 : i32
    %c3_i32 = arith.constant 3 : i32
    %15 = arith.subi %c3_i32, %c0_i32_17 : i32
    %c0_18 = arith.constant 0 : index
    %16 = arith.index_cast %c0_i32_17 : i32 to index
    %c0_19 = arith.constant 0 : index
    %c0_20 = arith.constant 0 : index
    %17 = vector.load %arg1[%c0_18, %16, %c0_19, %c0_20] : memref<1x4x8x128xbf16, #tpu.memory_space<vmem>>, vector<1x1x8x128xbf16>
    %18 = vector.shape_cast %17 : vector<1x1x8x128xbf16> to vector<8x128xbf16>
    %19 = arith.extf %18 : vector<8x128xbf16> to vector<8x128xf32>
    %cst = arith.constant dense<0.000000e+00> : vector<8x128xf32>
    %20 = tpu.matmul %8, %4, %cst {dimension_numbers = #tpu.dot_dimension_numbers<[1], [0], [0], [1], [0, 0, 1, 1], [], []>} : vector<8x32xbf16>, vector<32x128xbf16>, vector<8x128xf32> -> vector<8x128xf32>
    %21 = arith.addf %19, %20 : vector<8x128xf32>
    %c0_21 = arith.constant 0 : index
    %22 = arith.index_cast %15 : i32 to index
    %c0_22 = arith.constant 0 : index
    %c0_23 = arith.constant 0 : index
    %23 = vector.load %arg2[%c0_21, %22, %c0_22, %c0_23] : memref<1x4x8x128xbf16, #tpu.memory_space<vmem>>, vector<1x1x8x128xbf16>
    %24 = vector.shape_cast %23 : vector<1x1x8x128xbf16> to vector<8x128xbf16>
    %25 = arith.extf %24 : vector<8x128xbf16> to vector<8x128xf32>
    %cst_24 = arith.constant dense<0.000000e+00> : vector<8x128xf32>
    %26 = tpu.matmul %12, %6, %cst_24 {dimension_numbers = #tpu.dot_dimension_numbers<[1], [0], [0], [1], [0, 0, 1, 1], [], []>} : vector<8x32xbf16>, vector<32x128xbf16>, vector<8x128xf32> -> vector<8x128xf32>
    %27 = arith.addf %25, %26 : vector<8x128xf32>
    %28 = vector.extract_strided_slice %21 {offsets = [0, 0], sizes = [8, 96], strides = [1, 1]} : vector<8x128xf32> to vector<8x96xf32>
    %29 = arith.negf %28 : vector<8x96xf32>
    %30 = math.exp %29 : vector<8x96xf32>
    %cst_25 = arith.constant 1.000000e+00 : f32
    %31 = vector.broadcast %cst_25 : f32 to vector<8x96xf32>
    %32 = arith.addf %31, %30 : vector<8x96xf32>
    %33 = arith.divf %31, %32 : vector<8x96xf32>
    %34 = vector.extract_strided_slice %21 {offsets = [0, 96], sizes = [8, 32], strides = [1, 1]} : vector<8x128xf32> to vector<8x32xf32>
    %35 = math.tanh %34 : vector<8x32xf32>
    %36 = vector.extract_strided_slice %27 {offsets = [0, 0], sizes = [8, 96], strides = [1, 1]} : vector<8x128xf32> to vector<8x96xf32>
    %37 = arith.negf %36 : vector<8x96xf32>
    %38 = math.exp %37 : vector<8x96xf32>
    %cst_26 = arith.constant 1.000000e+00 : f32
    %39 = vector.broadcast %cst_26 : f32 to vector<8x96xf32>
    %40 = arith.addf %39, %38 : vector<8x96xf32>
    %41 = arith.divf %39, %40 : vector<8x96xf32>
    %42 = vector.extract_strided_slice %27 {offsets = [0, 96], sizes = [8, 32], strides = [1, 1]} : vector<8x128xf32> to vector<8x32xf32>
    %43 = math.tanh %42 : vector<8x32xf32>
    %44 = arith.index_cast %c0_i32_17 : i32 to index
    %c0_27 = arith.constant 0 : index
    %c0_28 = arith.constant 0 : index
    %45 = vector.load %arg3[%44, %c0_27, %c0_28] : memref<4x8x1xf32, #tpu.memory_space<vmem>>, vector<1x8x1xf32>
    %46 = vector.shape_cast %45 : vector<1x8x1xf32> to vector<8x1xf32>
    %47 = arith.index_cast %15 : i32 to index
    %c0_29 = arith.constant 0 : index
    %c0_30 = arith.constant 0 : index
    %48 = vector.load %arg4[%47, %c0_29, %c0_30] : memref<4x8x1xf32, #tpu.memory_space<vmem>>, vector<1x8x1xf32>
    %49 = vector.shape_cast %48 : vector<1x8x1xf32> to vector<8x1xf32>
    %50 = vector.extract_strided_slice %33 {offsets = [0, 32], sizes = [8, 32], strides = [1, 1]} : vector<8x96xf32> to vector<8x32xf32>
    %51 = arith.mulf %50, %10 : vector<8x32xf32>
    %52 = vector.extract_strided_slice %33 {offsets = [0, 0], sizes = [8, 32], strides = [1, 1]} : vector<8x96xf32> to vector<8x32xf32>
    %53 = arith.mulf %52, %35 : vector<8x32xf32>
    %54 = arith.addf %51, %53 : vector<8x32xf32>
    %55 = vector.broadcast %46 : vector<8x1xf32> to vector<8x32xf32>
    %56 = arith.mulf %54, %55 : vector<8x32xf32>
    %57 = vector.extract_strided_slice %33 {offsets = [0, 64], sizes = [8, 32], strides = [1, 1]} : vector<8x96xf32> to vector<8x32xf32>
    %58 = math.tanh %56 : vector<8x32xf32>
    %59 = arith.mulf %57, %58 : vector<8x32xf32>
    %60 = vector.broadcast %46 : vector<8x1xf32> to vector<8x32xf32>
    %61 = arith.mulf %59, %60 : vector<8x32xf32>
    %62 = vector.extract_strided_slice %41 {offsets = [0, 32], sizes = [8, 32], strides = [1, 1]} : vector<8x96xf32> to vector<8x32xf32>
    %63 = arith.mulf %62, %14 : vector<8x32xf32>
    %64 = vector.extract_strided_slice %41 {offsets = [0, 0], sizes = [8, 32], strides = [1, 1]} : vector<8x96xf32> to vector<8x32xf32>
    %65 = arith.mulf %64, %43 : vector<8x32xf32>
    %66 = arith.addf %63, %65 : vector<8x32xf32>
    %67 = vector.broadcast %49 : vector<8x1xf32> to vector<8x32xf32>
    %68 = arith.mulf %66, %67 : vector<8x32xf32>
    %69 = vector.extract_strided_slice %41 {offsets = [0, 64], sizes = [8, 32], strides = [1, 1]} : vector<8x96xf32> to vector<8x32xf32>
    %70 = math.tanh %68 : vector<8x32xf32>
    %71 = arith.mulf %69, %70 : vector<8x32xf32>
    %72 = vector.broadcast %49 : vector<8x1xf32> to vector<8x32xf32>
    %73 = arith.mulf %71, %72 : vector<8x32xf32>
    %74 = arith.index_cast %c0_i32_17 : i32 to index
    %c0_31 = arith.constant 0 : index
    %c0_32 = arith.constant 0 : index
    %75 = vector.load %arg6[%74, %c0_31, %c0_32] : memref<4x8x32xf32, #tpu.memory_space<vmem>>, vector<1x8x32xf32>
    %76 = vector.shape_cast %75 : vector<1x8x32xf32> to vector<8x32xf32>
    %77 = vector.shape_cast %61 : vector<8x32xf32> to vector<1x8x32xf32>
    tpu.vector_store %arg6[%74, %c0_31, %c0_32], %77 {strides = array<i32>} : memref<4x8x32xf32, #tpu.memory_space<vmem>>, vector<1x8x32xf32>,
    %78 = arith.index_cast %15 : i32 to index
    %c0_33 = arith.constant 0 : index
    %c0_34 = arith.constant 0 : index
    %79 = vector.load %arg7[%78, %c0_33, %c0_34] : memref<4x8x32xf32, #tpu.memory_space<vmem>>, vector<1x8x32xf32>
    %80 = vector.shape_cast %79 : vector<1x8x32xf32> to vector<8x32xf32>
    %81 = vector.shape_cast %73 : vector<8x32xf32> to vector<1x8x32xf32>
    tpu.vector_store %arg7[%78, %c0_33, %c0_34], %81 {strides = array<i32>} : memref<4x8x32xf32, #tpu.memory_space<vmem>>, vector<1x8x32xf32>,
    %82 = arith.truncf %61 : vector<8x32xf32> to vector<8x32xbf16>
    %83 = arith.truncf %73 : vector<8x32xf32> to vector<8x32xbf16>
    %c1_i32 = arith.constant 1 : i32
    %c3_i32_35 = arith.constant 3 : i32
    %84 = arith.subi %c3_i32_35, %c1_i32 : i32
    %c0_36 = arith.constant 0 : index
    %85 = arith.index_cast %c1_i32 : i32 to index
    %c0_37 = arith.constant 0 : index
    %c0_38 = arith.constant 0 : index
    %86 = vector.load %arg1[%c0_36, %85, %c0_37, %c0_38] : memref<1x4x8x128xbf16, #tpu.memory_space<vmem>>, vector<1x1x8x128xbf16>
    %87 = vector.shape_cast %86 : vector<1x1x8x128xbf16> to vector<8x128xbf16>
    %88 = arith.extf %87 : vector<8x128xbf16> to vector<8x128xf32>
    %cst_39 = arith.constant dense<0.000000e+00> : vector<8x128xf32>
    %89 = tpu.matmul %82, %4, %cst_39 {dimension_numbers = #tpu.dot_dimension_numbers<[1], [0], [0], [1], [0, 0, 1, 1], [], []>} : vector<8x32xbf16>, vector<32x128xbf16>, vector<8x128xf32> -> vector<8x128xf32>
    %90 = arith.addf %88, %89 : vector<8x128xf32>
    %c0_40 = arith.constant 0 : index
    %91 = arith.index_cast %84 : i32 to index
    %c0_41 = arith.constant 0 : index
    %c0_42 = arith.constant 0 : index
    %92 = vector.load %arg2[%c0_40, %91, %c0_41, %c0_42] : memref<1x4x8x128xbf16, #tpu.memory_space<vmem>>, vector<1x1x8x128xbf16>
    %93 = vector.shape_cast %92 : vector<1x1x8x128xbf16> to vector<8x128xbf16>
    %94 = arith.extf %93 : vector<8x128xbf16> to vector<8x128xf32>
    %cst_43 = arith.constant dense<0.000000e+00> : vector<8x128xf32>
    %95 = tpu.matmul %83, %6, %cst_43 {dimension_numbers = #tpu.dot_dimension_numbers<[1], [0], [0], [1], [0, 0, 1, 1], [], []>} : vector<8x32xbf16>, vector<32x128xbf16>, vector<8x128xf32> -> vector<8x128xf32>
    %96 = arith.addf %94, %95 : vector<8x128xf32>
    %97 = vector.extract_strided_slice %90 {offsets = [0, 0], sizes = [8, 96], strides = [1, 1]} : vector<8x128xf32> to vector<8x96xf32>
    %98 = arith.negf %97 : vector<8x96xf32>
    %99 = math.exp %98 : vector<8x96xf32>
    %cst_44 = arith.constant 1.000000e+00 : f32
    %100 = vector.broadcast %cst_44 : f32 to vector<8x96xf32>
    %101 = arith.addf %100, %99 : vector<8x96xf32>
    %102 = arith.divf %100, %101 : vector<8x96xf32>
    %103 = vector.extract_strided_slice %90 {offsets = [0, 96], sizes = [8, 32], strides = [1, 1]} : vector<8x128xf32> to vector<8x32xf32>
    %104 = math.tanh %103 : vector<8x32xf32>
    %105 = vector.extract_strided_slice %96 {offsets = [0, 0], sizes = [8, 96], strides = [1, 1]} : vector<8x128xf32> to vector<8x96xf32>
    %106 = arith.negf %105 : vector<8x96xf32>
    %107 = math.exp %106 : vector<8x96xf32>
    %cst_45 = arith.constant 1.000000e+00 : f32
    %108 = vector.broadcast %cst_45 : f32 to vector<8x96xf32>
    %109 = arith.addf %108, %107 : vector<8x96xf32>
    %110 = arith.divf %108, %109 : vector<8x96xf32>
    %111 = vector.extract_strided_slice %96 {offsets = [0, 96], sizes = [8, 32], strides = [1, 1]} : vector<8x128xf32> to vector<8x32xf32>
    %112 = math.tanh %111 : vector<8x32xf32>
    %113 = arith.index_cast %c1_i32 : i32 to index
    %c0_46 = arith.constant 0 : index
    %c0_47 = arith.constant 0 : index
    %114 = vector.load %arg3[%113, %c0_46, %c0_47] : memref<4x8x1xf32, #tpu.memory_space<vmem>>, vector<1x8x1xf32>
    %115 = vector.shape_cast %114 : vector<1x8x1xf32> to vector<8x1xf32>
    %116 = arith.index_cast %84 : i32 to index
    %c0_48 = arith.constant 0 : index
    %c0_49 = arith.constant 0 : index
    %117 = vector.load %arg4[%116, %c0_48, %c0_49] : memref<4x8x1xf32, #tpu.memory_space<vmem>>, vector<1x8x1xf32>
    %118 = vector.shape_cast %117 : vector<1x8x1xf32> to vector<8x1xf32>
    %119 = vector.extract_strided_slice %102 {offsets = [0, 32], sizes = [8, 32], strides = [1, 1]} : vector<8x96xf32> to vector<8x32xf32>
    %120 = arith.mulf %119, %56 : vector<8x32xf32>
    %121 = vector.extract_strided_slice %102 {offsets = [0, 0], sizes = [8, 32], strides = [1, 1]} : vector<8x96xf32> to vector<8x32xf32>
    %122 = arith.mulf %121, %104 : vector<8x32xf32>
    %123 = arith.addf %120, %122 : vector<8x32xf32>
    %124 = vector.broadcast %115 : vector<8x1xf32> to vector<8x32xf32>
    %125 = arith.mulf %123, %124 : vector<8x32xf32>
    %126 = vector.extract_strided_slice %102 {offsets = [0, 64], sizes = [8, 32], strides = [1, 1]} : vector<8x96xf32> to vector<8x32xf32>
    %127 = math.tanh %125 : vector<8x32xf32>
    %128 = arith.mulf %126, %127 : vector<8x32xf32>
    %129 = vector.broadcast %115 : vector<8x1xf32> to vector<8x32xf32>
    %130 = arith.mulf %128, %129 : vector<8x32xf32>
    %131 = vector.extract_strided_slice %110 {offsets = [0, 32], sizes = [8, 32], strides = [1, 1]} : vector<8x96xf32> to vector<8x32xf32>
    %132 = arith.mulf %131, %68 : vector<8x32xf32>
    %133 = vector.extract_strided_slice %110 {offsets = [0, 0], sizes = [8, 32], strides = [1, 1]} : vector<8x96xf32> to vector<8x32xf32>
    %134 = arith.mulf %133, %112 : vector<8x32xf32>
    %135 = arith.addf %132, %134 : vector<8x32xf32>
    %136 = vector.broadcast %118 : vector<8x1xf32> to vector<8x32xf32>
    %137 = arith.mulf %135, %136 : vector<8x32xf32>
    %138 = vector.extract_strided_slice %110 {offsets = [0, 64], sizes = [8, 32], strides = [1, 1]} : vector<8x96xf32> to vector<8x32xf32>
    %139 = math.tanh %137 : vector<8x32xf32>
    %140 = arith.mulf %138, %139 : vector<8x32xf32>
    %141 = vector.broadcast %118 : vector<8x1xf32> to vector<8x32xf32>
    %142 = arith.mulf %140, %141 : vector<8x32xf32>
    %143 = arith.index_cast %c1_i32 : i32 to index
    %c0_50 = arith.constant 0 : index
    %c0_51 = arith.constant 0 : index
    %144 = vector.load %arg6[%143, %c0_50, %c0_51] : memref<4x8x32xf32, #tpu.memory_space<vmem>>, vector<1x8x32xf32>
    %145 = vector.shape_cast %144 : vector<1x8x32xf32> to vector<8x32xf32>
    %146 = vector.shape_cast %130 : vector<8x32xf32> to vector<1x8x32xf32>
    tpu.vector_store %arg6[%143, %c0_50, %c0_51], %146 {strides = array<i32>} : memref<4x8x32xf32, #tpu.memory_space<vmem>>, vector<1x8x32xf32>,
    %147 = arith.index_cast %84 : i32 to index
    %c0_52 = arith.constant 0 : index
    %c0_53 = arith.constant 0 : index
    %148 = vector.load %arg7[%147, %c0_52, %c0_53] : memref<4x8x32xf32, #tpu.memory_space<vmem>>, vector<1x8x32xf32>
    %149 = vector.shape_cast %148 : vector<1x8x32xf32> to vector<8x32xf32>
    %150 = vector.shape_cast %142 : vector<8x32xf32> to vector<1x8x32xf32>
    tpu.vector_store %arg7[%147, %c0_52, %c0_53], %150 {strides = array<i32>} : memref<4x8x32xf32, #tpu.memory_space<vmem>>, vector<1x8x32xf32>,
    %151 = arith.truncf %130 : vector<8x32xf32> to vector<8x32xbf16>
    %152 = arith.truncf %142 : vector<8x32xf32> to vector<8x32xbf16>
    %c2_i32 = arith.constant 2 : i32
    %c3_i32_54 = arith.constant 3 : i32
    %153 = arith.subi %c3_i32_54, %c2_i32 : i32
    %c0_55 = arith.constant 0 : index
    %154 = arith.index_cast %c2_i32 : i32 to index
    %c0_56 = arith.constant 0 : index
    %c0_57 = arith.constant 0 : index
    %155 = vector.load %arg1[%c0_55, %154, %c0_56, %c0_57] : memref<1x4x8x128xbf16, #tpu.memory_space<vmem>>, vector<1x1x8x128xbf16>
    %156 = vector.shape_cast %155 : vector<1x1x8x128xbf16> to vector<8x128xbf16>
    %157 = arith.extf %156 : vector<8x128xbf16> to vector<8x128xf32>
    %cst_58 = arith.constant dense<0.000000e+00> : vector<8x128xf32>
    %158 = tpu.matmul %151, %4, %cst_58 {dimension_numbers = #tpu.dot_dimension_numbers<[1], [0], [0], [1], [0, 0, 1, 1], [], []>} : vector<8x32xbf16>, vector<32x128xbf16>, vector<8x128xf32> -> vector<8x128xf32>
    %159 = arith.addf %157, %158 : vector<8x128xf32>
    %c0_59 = arith.constant 0 : index
    %160 = arith.index_cast %153 : i32 to index
    %c0_60 = arith.constant 0 : index
    %c0_61 = arith.constant 0 : index
    %161 = vector.load %arg2[%c0_59, %160, %c0_60, %c0_61] : memref<1x4x8x128xbf16, #tpu.memory_space<vmem>>, vector<1x1x8x128xbf16>
    %162 = vector.shape_cast %161 : vector<1x1x8x128xbf16> to vector<8x128xbf16>
    %163 = arith.extf %162 : vector<8x128xbf16> to vector<8x128xf32>
    %cst_62 = arith.constant dense<0.000000e+00> : vector<8x128xf32>
    %164 = tpu.matmul %152, %6, %cst_62 {dimension_numbers = #tpu.dot_dimension_numbers<[1], [0], [0], [1], [0, 0, 1, 1], [], []>} : vector<8x32xbf16>, vector<32x128xbf16>, vector<8x128xf32> -> vector<8x128xf32>
    %165 = arith.addf %163, %164 : vector<8x128xf32>
    %166 = vector.extract_strided_slice %159 {offsets = [0, 0], sizes = [8, 96], strides = [1, 1]} : vector<8x128xf32> to vector<8x96xf32>
    %167 = arith.negf %166 : vector<8x96xf32>
    %168 = math.exp %167 : vector<8x96xf32>
    %cst_63 = arith.constant 1.000000e+00 : f32
    %169 = vector.broadcast %cst_63 : f32 to vector<8x96xf32>
    %170 = arith.addf %169, %168 : vector<8x96xf32>
    %171 = arith.divf %169, %170 : vector<8x96xf32>
    %172 = vector.extract_strided_slice %159 {offsets = [0, 96], sizes = [8, 32], strides = [1, 1]} : vector<8x128xf32> to vector<8x32xf32>
    %173 = math.tanh %172 : vector<8x32xf32>
    %174 = vector.extract_strided_slice %165 {offsets = [0, 0], sizes = [8, 96], strides = [1, 1]} : vector<8x128xf32> to vector<8x96xf32>
    %175 = arith.negf %174 : vector<8x96xf32>
    %176 = math.exp %175 : vector<8x96xf32>
    %cst_64 = arith.constant 1.000000e+00 : f32
    %177 = vector.broadcast %cst_64 : f32 to vector<8x96xf32>
    %178 = arith.addf %177, %176 : vector<8x96xf32>
    %179 = arith.divf %177, %178 : vector<8x96xf32>
    %180 = vector.extract_strided_slice %165 {offsets = [0, 96], sizes = [8, 32], strides = [1, 1]} : vector<8x128xf32> to vector<8x32xf32>
    %181 = math.tanh %180 : vector<8x32xf32>
    %182 = arith.index_cast %c2_i32 : i32 to index
    %c0_65 = arith.constant 0 : index
    %c0_66 = arith.constant 0 : index
    %183 = vector.load %arg3[%182, %c0_65, %c0_66] : memref<4x8x1xf32, #tpu.memory_space<vmem>>, vector<1x8x1xf32>
    %184 = vector.shape_cast %183 : vector<1x8x1xf32> to vector<8x1xf32>
    %185 = arith.index_cast %153 : i32 to index
    %c0_67 = arith.constant 0 : index
    %c0_68 = arith.constant 0 : index
    %186 = vector.load %arg4[%185, %c0_67, %c0_68] : memref<4x8x1xf32, #tpu.memory_space<vmem>>, vector<1x8x1xf32>
    %187 = vector.shape_cast %186 : vector<1x8x1xf32> to vector<8x1xf32>
    %188 = vector.extract_strided_slice %171 {offsets = [0, 32], sizes = [8, 32], strides = [1, 1]} : vector<8x96xf32> to vector<8x32xf32>
    %189 = arith.mulf %188, %125 : vector<8x32xf32>
    %190 = vector.extract_strided_slice %171 {offsets = [0, 0], sizes = [8, 32], strides = [1, 1]} : vector<8x96xf32> to vector<8x32xf32>
    %191 = arith.mulf %190, %173 : vector<8x32xf32>
    %192 = arith.addf %189, %191 : vector<8x32xf32>
    %193 = vector.broadcast %184 : vector<8x1xf32> to vector<8x32xf32>
    %194 = arith.mulf %192, %193 : vector<8x32xf32>
    %195 = vector.extract_strided_slice %171 {offsets = [0, 64], sizes = [8, 32], strides = [1, 1]} : vector<8x96xf32> to vector<8x32xf32>
    %196 = math.tanh %194 : vector<8x32xf32>
    %197 = arith.mulf %195, %196 : vector<8x32xf32>
    %198 = vector.broadcast %184 : vector<8x1xf32> to vector<8x32xf32>
    %199 = arith.mulf %197, %198 : vector<8x32xf32>
    %200 = vector.extract_strided_slice %179 {offsets = [0, 32], sizes = [8, 32], strides = [1, 1]} : vector<8x96xf32> to vector<8x32xf32>
    %201 = arith.mulf %200, %137 : vector<8x32xf32>
    %202 = vector.extract_strided_slice %179 {offsets = [0, 0], sizes = [8, 32], strides = [1, 1]} : vector<8x96xf32> to vector<8x32xf32>
    %203 = arith.mulf %202, %181 : vector<8x32xf32>
    %204 = arith.addf %201, %203 : vector<8x32xf32>
    %205 = vector.broadcast %187 : vector<8x1xf32> to vector<8x32xf32>
    %206 = arith.mulf %204, %205 : vector<8x32xf32>
    %207 = vector.extract_strided_slice %179 {offsets = [0, 64], sizes = [8, 32], strides = [1, 1]} : vector<8x96xf32> to vector<8x32xf32>
    %208 = math.tanh %206 : vector<8x32xf32>
    %209 = arith.mulf %207, %208 : vector<8x32xf32>
    %210 = vector.broadcast %187 : vector<8x1xf32> to vector<8x32xf32>
    %211 = arith.mulf %209, %210 : vector<8x32xf32>
    %212 = arith.index_cast %c2_i32 : i32 to index
    %c0_69 = arith.constant 0 : index
    %c0_70 = arith.constant 0 : index
    %213 = vector.load %arg6[%212, %c0_69, %c0_70] : memref<4x8x32xf32, #tpu.memory_space<vmem>>, vector<1x8x32xf32>
    %214 = vector.shape_cast %213 : vector<1x8x32xf32> to vector<8x32xf32>
    %215 = vector.shape_cast %199 : vector<8x32xf32> to vector<1x8x32xf32>
    tpu.vector_store %arg6[%212, %c0_69, %c0_70], %215 {strides = array<i32>} : memref<4x8x32xf32, #tpu.memory_space<vmem>>, vector<1x8x32xf32>,
    %216 = arith.index_cast %153 : i32 to index
    %c0_71 = arith.constant 0 : index
    %c0_72 = arith.constant 0 : index
    %217 = vector.load %arg7[%216, %c0_71, %c0_72] : memref<4x8x32xf32, #tpu.memory_space<vmem>>, vector<1x8x32xf32>
    %218 = vector.shape_cast %217 : vector<1x8x32xf32> to vector<8x32xf32>
    %219 = vector.shape_cast %211 : vector<8x32xf32> to vector<1x8x32xf32>
    tpu.vector_store %arg7[%216, %c0_71, %c0_72], %219 {strides = array<i32>} : memref<4x8x32xf32, #tpu.memory_space<vmem>>, vector<1x8x32xf32>,
    %220 = arith.truncf %199 : vector<8x32xf32> to vector<8x32xbf16>
    %221 = arith.truncf %211 : vector<8x32xf32> to vector<8x32xbf16>
    %c3_i32_73 = arith.constant 3 : i32
    %c3_i32_74 = arith.constant 3 : i32
    %222 = arith.subi %c3_i32_74, %c3_i32_73 : i32
    %c0_75 = arith.constant 0 : index
    %223 = arith.index_cast %c3_i32_73 : i32 to index
    %c0_76 = arith.constant 0 : index
    %c0_77 = arith.constant 0 : index
    %224 = vector.load %arg1[%c0_75, %223, %c0_76, %c0_77] : memref<1x4x8x128xbf16, #tpu.memory_space<vmem>>, vector<1x1x8x128xbf16>
    %225 = vector.shape_cast %224 : vector<1x1x8x128xbf16> to vector<8x128xbf16>
    %226 = arith.extf %225 : vector<8x128xbf16> to vector<8x128xf32>
    %cst_78 = arith.constant dense<0.000000e+00> : vector<8x128xf32>
    %227 = tpu.matmul %220, %4, %cst_78 {dimension_numbers = #tpu.dot_dimension_numbers<[1], [0], [0], [1], [0, 0, 1, 1], [], []>} : vector<8x32xbf16>, vector<32x128xbf16>, vector<8x128xf32> -> vector<8x128xf32>
    %228 = arith.addf %226, %227 : vector<8x128xf32>
    %c0_79 = arith.constant 0 : index
    %229 = arith.index_cast %222 : i32 to index
    %c0_80 = arith.constant 0 : index
    %c0_81 = arith.constant 0 : index
    %230 = vector.load %arg2[%c0_79, %229, %c0_80, %c0_81] : memref<1x4x8x128xbf16, #tpu.memory_space<vmem>>, vector<1x1x8x128xbf16>
    %231 = vector.shape_cast %230 : vector<1x1x8x128xbf16> to vector<8x128xbf16>
    %232 = arith.extf %231 : vector<8x128xbf16> to vector<8x128xf32>
    %cst_82 = arith.constant dense<0.000000e+00> : vector<8x128xf32>
    %233 = tpu.matmul %221, %6, %cst_82 {dimension_numbers = #tpu.dot_dimension_numbers<[1], [0], [0], [1], [0, 0, 1, 1], [], []>} : vector<8x32xbf16>, vector<32x128xbf16>, vector<8x128xf32> -> vector<8x128xf32>
    %234 = arith.addf %232, %233 : vector<8x128xf32>
    %235 = vector.extract_strided_slice %228 {offsets = [0, 0], sizes = [8, 96], strides = [1, 1]} : vector<8x128xf32> to vector<8x96xf32>
    %236 = arith.negf %235 : vector<8x96xf32>
    %237 = math.exp %236 : vector<8x96xf32>
    %cst_83 = arith.constant 1.000000e+00 : f32
    %238 = vector.broadcast %cst_83 : f32 to vector<8x96xf32>
    %239 = arith.addf %238, %237 : vector<8x96xf32>
    %240 = arith.divf %238, %239 : vector<8x96xf32>
    %241 = vector.extract_strided_slice %228 {offsets = [0, 96], sizes = [8, 32], strides = [1, 1]} : vector<8x128xf32> to vector<8x32xf32>
    %242 = math.tanh %241 : vector<8x32xf32>
    %243 = vector.extract_strided_slice %234 {offsets = [0, 0], sizes = [8, 96], strides = [1, 1]} : vector<8x128xf32> to vector<8x96xf32>
    %244 = arith.negf %243 : vector<8x96xf32>
    %245 = math.exp %244 : vector<8x96xf32>
    %cst_84 = arith.constant 1.000000e+00 : f32
    %246 = vector.broadcast %cst_84 : f32 to vector<8x96xf32>
    %247 = arith.addf %246, %245 : vector<8x96xf32>
    %248 = arith.divf %246, %247 : vector<8x96xf32>
    %249 = vector.extract_strided_slice %234 {offsets = [0, 96], sizes = [8, 32], strides = [1, 1]} : vector<8x128xf32> to vector<8x32xf32>
    %250 = math.tanh %249 : vector<8x32xf32>
    %251 = arith.index_cast %c3_i32_73 : i32 to index
    %c0_85 = arith.constant 0 : index
    %c0_86 = arith.constant 0 : index
    %252 = vector.load %arg3[%251, %c0_85, %c0_86] : memref<4x8x1xf32, #tpu.memory_space<vmem>>, vector<1x8x1xf32>
    %253 = vector.shape_cast %252 : vector<1x8x1xf32> to vector<8x1xf32>
    %254 = arith.index_cast %222 : i32 to index
    %c0_87 = arith.constant 0 : index
    %c0_88 = arith.constant 0 : index
    %255 = vector.load %arg4[%254, %c0_87, %c0_88] : memref<4x8x1xf32, #tpu.memory_space<vmem>>, vector<1x8x1xf32>
    %256 = vector.shape_cast %255 : vector<1x8x1xf32> to vector<8x1xf32>
    %257 = vector.extract_strided_slice %240 {offsets = [0, 32], sizes = [8, 32], strides = [1, 1]} : vector<8x96xf32> to vector<8x32xf32>
    %258 = arith.mulf %257, %194 : vector<8x32xf32>
    %259 = vector.extract_strided_slice %240 {offsets = [0, 0], sizes = [8, 32], strides = [1, 1]} : vector<8x96xf32> to vector<8x32xf32>
    %260 = arith.mulf %259, %242 : vector<8x32xf32>
    %261 = arith.addf %258, %260 : vector<8x32xf32>
    %262 = vector.broadcast %253 : vector<8x1xf32> to vector<8x32xf32>
    %263 = arith.mulf %261, %262 : vector<8x32xf32>
    %264 = vector.extract_strided_slice %240 {offsets = [0, 64], sizes = [8, 32], strides = [1, 1]} : vector<8x96xf32> to vector<8x32xf32>
    %265 = math.tanh %263 : vector<8x32xf32>
    %266 = arith.mulf %264, %265 : vector<8x32xf32>
    %267 = vector.broadcast %253 : vector<8x1xf32> to vector<8x32xf32>
    %268 = arith.mulf %266, %267 : vector<8x32xf32>
    %269 = vector.extract_strided_slice %248 {offsets = [0, 32], sizes = [8, 32], strides = [1, 1]} : vector<8x96xf32> to vector<8x32xf32>
    %270 = arith.mulf %269, %206 : vector<8x32xf32>
    %271 = vector.extract_strided_slice %248 {offsets = [0, 0], sizes = [8, 32], strides = [1, 1]} : vector<8x96xf32> to vector<8x32xf32>
    %272 = arith.mulf %271, %250 : vector<8x32xf32>
    %273 = arith.addf %270, %272 : vector<8x32xf32>
    %274 = vector.broadcast %256 : vector<8x1xf32> to vector<8x32xf32>
    %275 = arith.mulf %273, %274 : vector<8x32xf32>
    %276 = vector.extract_strided_slice %248 {offsets = [0, 64], sizes = [8, 32], strides = [1, 1]} : vector<8x96xf32> to vector<8x32xf32>
    %277 = math.tanh %275 : vector<8x32xf32>
    %278 = arith.mulf %276, %277 : vector<8x32xf32>
    %279 = vector.broadcast %256 : vector<8x1xf32> to vector<8x32xf32>
    %280 = arith.mulf %278, %279 : vector<8x32xf32>
    %281 = arith.index_cast %c3_i32_73 : i32 to index
    %c0_89 = arith.constant 0 : index
    %c0_90 = arith.constant 0 : index
    %282 = vector.load %arg6[%281, %c0_89, %c0_90] : memref<4x8x32xf32, #tpu.memory_space<vmem>>, vector<1x8x32xf32>
    %283 = vector.shape_cast %282 : vector<1x8x32xf32> to vector<8x32xf32>
    %284 = vector.shape_cast %268 : vector<8x32xf32> to vector<1x8x32xf32>
    tpu.vector_store %arg6[%281, %c0_89, %c0_90], %284 {strides = array<i32>} : memref<4x8x32xf32, #tpu.memory_space<vmem>>, vector<1x8x32xf32>,
    %285 = arith.index_cast %222 : i32 to index
    %c0_91 = arith.constant 0 : index
    %c0_92 = arith.constant 0 : index
    %286 = vector.load %arg7[%285, %c0_91, %c0_92] : memref<4x8x32xf32, #tpu.memory_space<vmem>>, vector<1x8x32xf32>
    %287 = vector.shape_cast %286 : vector<1x8x32xf32> to vector<8x32xf32>
    %288 = vector.shape_cast %280 : vector<8x32xf32> to vector<1x8x32xf32>
    tpu.vector_store %arg7[%285, %c0_91, %c0_92], %288 {strides = array<i32>} : memref<4x8x32xf32, #tpu.memory_space<vmem>>, vector<1x8x32xf32>,
    %289 = arith.truncf %268 : vector<8x32xf32> to vector<8x32xbf16>
    %290 = arith.truncf %280 : vector<8x32xf32> to vector<8x32xbf16>
    %c4_i32 = arith.constant 4 : i32
    %c0_93 = arith.constant 0 : index
    %c0_94 = arith.constant 0 : index
    %c0_95 = arith.constant 0 : index
    %291 = vector.load %arg8[%c0_93, %c0_94, %c0_95] : memref<2x8x32xbf16, #tpu.memory_space<vmem>>, vector<1x8x32xbf16>
    %292 = vector.shape_cast %291 : vector<1x8x32xbf16> to vector<8x32xbf16>
    %293 = vector.shape_cast %289 : vector<8x32xbf16> to vector<1x8x32xbf16>
    tpu.vector_store %arg8[%c0_93, %c0_94, %c0_95], %293 {strides = array<i32>} : memref<2x8x32xbf16, #tpu.memory_space<vmem>>, vector<1x8x32xbf16>,
    %c1_96 = arith.constant 1 : index
    %c0_97 = arith.constant 0 : index
    %c0_98 = arith.constant 0 : index
    %294 = vector.load %arg8[%c1_96, %c0_97, %c0_98] : memref<2x8x32xbf16, #tpu.memory_space<vmem>>, vector<1x8x32xbf16>
    %295 = vector.shape_cast %294 : vector<1x8x32xbf16> to vector<8x32xbf16>
    %296 = vector.shape_cast %290 : vector<8x32xbf16> to vector<1x8x32xbf16>
    tpu.vector_store %arg8[%c1_96, %c0_97, %c0_98], %296 {strides = array<i32>} : memref<2x8x32xbf16, #tpu.memory_space<vmem>>, vector<1x8x32xbf16>,
    %c0_99 = arith.constant 0 : index
    %c0_100 = arith.constant 0 : index
    %c0_101 = arith.constant 0 : index
    %297 = vector.load %arg9[%c0_99, %c0_100, %c0_101] : memref<2x8x32xf32, #tpu.memory_space<vmem>>, vector<1x8x32xf32>
    %298 = vector.shape_cast %297 : vector<1x8x32xf32> to vector<8x32xf32>
    %299 = vector.shape_cast %263 : vector<8x32xf32> to vector<1x8x32xf32>
    tpu.vector_store %arg9[%c0_99, %c0_100, %c0_101], %299 {strides = array<i32>} : memref<2x8x32xf32, #tpu.memory_space<vmem>>, vector<1x8x32xf32>,
    %c1_102 = arith.constant 1 : index
    %c0_103 = arith.constant 0 : index
    %c0_104 = arith.constant 0 : index
    %300 = vector.load %arg9[%c1_102, %c0_103, %c0_104] : memref<2x8x32xf32, #tpu.memory_space<vmem>>, vector<1x8x32xf32>
    %301 = vector.shape_cast %300 : vector<1x8x32xf32> to vector<8x32xf32>
    %302 = vector.shape_cast %275 : vector<8x32xf32> to vector<1x8x32xf32>
    tpu.vector_store %arg9[%c1_102, %c0_103, %c0_104], %302 {strides = array<i32>} : memref<2x8x32xf32, #tpu.memory_space<vmem>>, vector<1x8x32xf32>,
    return
  }
  func.func @transform_0(%arg0: i32) -> (i32, i32, i32, i32) {
    %c0_i32 = arith.constant 0 : i32
    %c0_i32_0 = arith.constant 0 : i32
    %c0_i32_1 = arith.constant 0 : i32
    %c0_i32_2 = arith.constant 0 : i32
    return %c0_i32, %arg0, %c0_i32_0, %c0_i32_1 : i32, i32, i32, i32
  }
  func.func @transform_1(%arg0: i32) -> (i32, i32, i32, i32) {
    %c2_i32 = arith.constant 2 : i32
    %0 = arith.subi %c2_i32, %arg0 : i32
    %c1_i32 = arith.constant 1 : i32
    %c0_i32 = arith.constant 0 : i32
    %c0_i32_0 = arith.constant 0 : i32
    %c0_i32_1 = arith.constant 0 : i32
    return %c1_i32, %0, %c0_i32, %c0_i32_0 : i32, i32, i32, i32
  }
  func.func @transform_2(%arg0: i32) -> (i32, i32, i32) {
    %c0_i32 = arith.constant 0 : i32
    %c0_i32_0 = arith.constant 0 : i32
    %c0_i32_1 = arith.constant 0 : i32
    return %arg0, %c0_i32, %c0_i32_0 : i32, i32, i32
  }
  func.func @transform_3(%arg0: i32) -> (i32, i32, i32) {
    %c2_i32 = arith.constant 2 : i32
    %0 = arith.subi %c2_i32, %arg0 : i32
    %c0_i32 = arith.constant 0 : i32
    %c0_i32_0 = arith.constant 0 : i32
    %c0_i32_1 = arith.constant 0 : i32
    return %0, %c0_i32, %c0_i32_0 : i32, i32, i32
  }
  func.func @transform_4(%arg0: i32) -> (i32, i32, i32) {
    %c0_i32 = arith.constant 0 : i32
    %c0_i32_0 = arith.constant 0 : i32
    %c0_i32_1 = arith.constant 0 : i32
    %c0_i32_2 = arith.constant 0 : i32
    return %c0_i32, %c0_i32_0, %c0_i32_1 : i32, i32, i32
  }
  func.func @transform_5(%arg0: i32) -> (i32, i32, i32) {
    %c0_i32 = arith.constant 0 : i32
    %c0_i32_0 = arith.constant 0 : i32
    %c0_i32_1 = arith.constant 0 : i32
    return %arg0, %c0_i32, %c0_i32_0 : i32, i32, i32
  }
  func.func @transform_6(%arg0: i32) -> (i32, i32, i32) {
    %c2_i32 = arith.constant 2 : i32
    %0 = arith.subi %c2_i32, %arg0 : i32
    %c0_i32 = arith.constant 0 : i32
    %c0_i32_0 = arith.constant 0 : i32
    %c0_i32_1 = arith.constant 0 : i32
    return %0, %c0_i32, %c0_i32_0 : i32, i32, i32
  }
}

</mosaic_0001>

<llo_original>
// kernel: tpu_custom_call.1
$region0: #{tpu_custom_call.1}
  #allocation0 [shape = 'u32[]', space=smem, size = 0x4, offset = 0x4, fixed_abs, tag = 'smem constant byte address 0x4 - core index']
  #allocation1 [shape = 'u32[144,128]{1,0:T(1,128)}', space=vmem, size = 0x12000, scoped, tag = 'internal scratch']
  #allocation2 [shape = 'bf16[2,8,32]{2,1,0:T(8,128)(2,1)}', space=vmem, size = 0x1000, scoped, tag = 'scratch operand']
  #allocation3 [shape = 'f32[2,8,32]{2,1,0:T(8,128)}', space=vmem, size = 0x2000, scoped, tag = 'scratch operand']
  %s0 = inlined_call_operand.vmem [shape: bf16[2,12,8,128], index: 0, kind: input, shape index: {}]
  %s1 = inlined_call_operand.vmem [shape: bf16[2,12,8,128], index: 1, kind: input, shape index: {}]
  %s2 = inlined_call_operand.vmem [shape: f32[12,8,1], index: 2, kind: input, shape index: {}]
  %s3 = inlined_call_operand.vmem [shape: f32[12,8,1], index: 3, kind: input, shape index: {}]
  %s4 = inlined_call_operand.hbm [shape: bf16[2,32,128], index: 4, kind: input, shape index: {}]
  %s5 = inlined_call_operand.hbm [shape: f32[12,8,32], index: 5, kind: output, shape index: {0}]
  %s6 = inlined_call_operand.hbm [shape: f32[12,8,32], index: 6, kind: output, shape index: {1}]
  %7 = xla_tuple %s5, %s6
  %s8 = sld [smem:[#allocation0]]
  $region69: #{tpu_custom_call.1} parent=0
    _
  %s10 = ssub.s32 1, %s8
  %s11 = scalar_select 0, %s10, %s8
  $region1: #{tpu_custom_call.1} parent=0
    #allocation4 [shape = 'u8[16384]{0}', space=vmem, size = 0x4000, scoped, tag = 'input window, operand 4, single buffered']
    #allocation5 [shape = 's32[2]{0}', space=sflag, size = 0x8, scoped, tag = 'scoped memory for tpu_custom_call.1']
    #allocation6 [shape = 's32[2]{0}', space=sflag, size = 0x8, scoped, tag = 'scoped memory for tpu_custom_call.1']
    #allocation7 [shape = 'u8[32768]{0}', space=vmem, size = 0x8000, scoped, tag = 'output window, operand 0']
    #allocation8 [shape = 'u8[32768]{0}', space=vmem, size = 0x8000, scoped, tag = 'output window, operand 1']
    #allocation9 [shape = 's32[2]{0}', space=sflag, size = 0x8, scoped, tag = 'scoped memory for tpu_custom_call.1']
    %12 = vsyncpa [#allocation5], 0
    %13 = vsyncpa [#allocation6], 0
    %s14 = scalar_lea.sflag [#allocation6], 1
    %15 = vsyncpa %s14, 0
    %16 = vsyncpa [#allocation9], 0
    %s17 = scalar_lea.sflag [#allocation9], 1
    %18 = vsyncpa %s17, 0
    loop: start=0, step=1, limit=5
    $region2: #{tpu_custom_call.1} parent=1 // loop_pre_header
      _
    $region3: #{tpu_custom_call.1} parent=1 // loop_header
      %s20 = sphi 0, %s24
      %p21 = scmp.ge.s32.totalorder %s20, 5
      %s30 = sphi 0, %s32
      %s33 = sphi 0, %s30
      %s34 = sphi 0, %s33
      %s50 = sphi 0, %s34
      %s58 = sphi 0, %s60
      %s61 = sphi 0, %s58
      %s62 = sphi 0, %s61
      %s78 = sphi 0, %s62
      %s84 = sphi 0, %s86
      %s87 = sphi 0, %s84
      %s88 = sphi 0, %s87
      %s104 = sphi 0, %s88
      %s112 = sphi 0, %s114
      %s115 = sphi 0, %s112
      %s116 = sphi 0, %s115
      %s132 = sphi 0, %s116
      %s136 = sphi 0, %s136
      %s138 = sphi 0, %s136
      %s139 = sphi 0, %s138
      %s153 = sphi 0, %s139
      %s159 = sphi 0, %s161
      %s162 = sphi 0, %s159
      %s163 = sphi 0, %s162
      %s179 = sphi 0, %s163
      %s187 = sphi 0, %s189
      %s190 = sphi 0, %s187
      %s191 = sphi 0, %s190
      %s207 = sphi 0, %s191
    $region4: #{tpu_custom_call.1} parent=1 // loop_header_branch
      %23 = sbr.rel (%p21) target = $region8
    $region5: #{tpu_custom_call.1} parent=1 // loop_body
      %s25 = ssub.s32 %s20, 1
      %s26 = ssub.s32 %s20, 2
      %s27 = sadd.s32 %s20, 1
      %s28 = ssub.s32 %s20, %s27
      %p29 = scmp.eq.s32.totalorder %s28, 0
      %s31 = sadd.s32 %s30, 1
      %s32 = scalar_select %p29, %s30, %s31
      %p35 = pneg %p29
      %p36 = scmp.eq.s32.totalorder %s20, 2
      %p37 = por %p35, %p36
      %p38 = scmp.ne.s32.totalorder %s30, %s33
      %p39 = scmp.eq.s32.totalorder %s20, 0
      %p40 = por %p38, %p39
      %p41 = scmp.ne.s32.totalorder %s30, %s33
      %p42 = scmp.eq.s32.totalorder %s25, 2
      %p43 = por %p41, %p42
      %p44 = scmp.ne.s32.totalorder %s33, %s34
      %p45 = scmp.eq.s32.totalorder %s25, 0
      %p46 = por %p44, %p45
      %p47 = scmp.ne.s32.totalorder %s33, %s34
      %p48 = scmp.eq.s32.totalorder %s26, 2
      %p49 = por %p47, %p48
      %p51 = scmp.ne.s32.totalorder %s34, %s50
      %p52 = scmp.eq.s32.totalorder %s26, 0
      %p53 = por %p51, %p52
      %s54 = ssub.s32 2, %s20
      %s55 = ssub.s32 2, %s27
      %s56 = ssub.s32 %s54, %s55
      %p57 = scmp.eq.s32.totalorder %s56, 0
      %s59 = sadd.s32 %s58, 1
      %s60 = scalar_select %p57, %s58, %s59
      %p63 = pneg %p57
      %p64 = scmp.eq.s32.totalorder %s20, 2
      %p65 = por %p63, %p64
      %p66 = scmp.ne.s32.totalorder %s58, %s61
      %p67 = scmp.eq.s32.totalorder %s20, 0
      %p68 = por %p66, %p67
      %p69 = scmp.ne.s32.totalorder %s58, %s61
      %p70 = scmp.eq.s32.totalorder %s25, 2
      %p71 = por %p69, %p70
      %p72 = scmp.ne.s32.totalorder %s61, %s62
      %p73 = scmp.eq.s32.totalorder %s25, 0
      %p74 = por %p72, %p73
      %p75 = scmp.ne.s32.totalorder %s61, %s62
      %p76 = scmp.eq.s32.totalorder %s26, 2
      %p77 = por %p75, %p76
      %p79 = scmp.ne.s32.totalorder %s62, %s78
      %p80 = scmp.eq.s32.totalorder %s26, 0
      %p81 = por %p79, %p80
      %s82 = ssub.s32 %s20, %s27
      %p83 = scmp.eq.s32.totalorder %s82, 0
      %s85 = sadd.s32 %s84, 1
      %s86 = scalar_select %p83, %s84, %s85
      %p89 = pneg %p83
      %p90 = scmp.eq.s32.totalorder %s20, 2
      %p91 = por %p89, %p90
      %p92 = scmp.ne.s32.totalorder %s84, %s87
      %p93 = scmp.eq.s32.totalorder %s20, 0
      %p94 = por %p92, %p93
      %p95 = scmp.ne.s32.totalorder %s84, %s87
      %p96 = scmp.eq.s32.totalorder %s25, 2
      %p97 = por %p95, %p96
      %p98 = scmp.ne.s32.totalorder %s87, %s88
      %p99 = scmp.eq.s32.totalorder %s25, 0
      %p100 = por %p98, %p99
      %p101 = scmp.ne.s32.totalorder %s87, %s88
      %p102 = scmp.eq.s32.totalorder %s26, 2
      %p103 = por %p101, %p102
      %p105 = scmp.ne.s32.totalorder %s88, %s104
      %p106 = scmp.eq.s32.totalorder %s26, 0
      %p107 = por %p105, %p106
      %s108 = ssub.s32 2, %s20
      %s109 = ssub.s32 2, %s27
      %s110 = ssub.s32 %s108, %s109
      %p111 = scmp.eq.s32.totalorder %s110, 0
      %s113 = sadd.s32 %s112, 1
      %s114 = scalar_select %p111, %s112, %s113
      %p117 = pneg %p111
      %p118 = scmp.eq.s32.totalorder %s20, 2
      %p119 = por %p117, %p118
      %p120 = scmp.ne.s32.totalorder %s112, %s115
      %p121 = scmp.eq.s32.totalorder %s20, 0
      %p122 = por %p120, %p121
      %p123 = scmp.ne.s32.totalorder %s112, %s115
      %p124 = scmp.eq.s32.totalorder %s25, 2
      %p125 = por %p123, %p124
      %p126 = scmp.ne.s32.totalorder %s115, %s116
      %p127 = scmp.eq.s32.totalorder %s25, 0
      %p128 = por %p126, %p127
      %p129 = scmp.ne.s32.totalorder %s115, %s116
      %p130 = scmp.eq.s32.totalorder %s26, 2
      %p131 = por %p129, %p130
      %p133 = scmp.ne.s32.totalorder %s116, %s132
      %p134 = scmp.eq.s32.totalorder %s26, 0
      %p135 = por %p133, %p134
      %s137 = sadd.s32 %s136, 1
      %p140 = scmp.eq.s32.totalorder %s20, 2
      %p141 = scmp.ne.s32.totalorder %s136, %s138
      %p142 = scmp.eq.s32.totalorder %s20, 0
      %p143 = por %p141, %p142
      %p144 = scmp.ne.s32.totalorder %s136, %s138
      %p145 = scmp.eq.s32.totalorder %s25, 2
      %p146 = por %p144, %p145
      %p147 = scmp.ne.s32.totalorder %s138, %s139
      %p148 = scmp.eq.s32.totalorder %s25, 0
      %p149 = por %p147, %p148
      %p150 = scmp.ne.s32.totalorder %s138, %s139
      %p151 = scmp.eq.s32.totalorder %s26, 2
      %p152 = por %p150, %p151
      %p154 = scmp.ne.s32.totalorder %s139, %s153
      %p155 = scmp.eq.s32.totalorder %s26, 0
      %p156 = por %p154, %p155
      %s157 = ssub.s32 %s20, %s27
      %p158 = scmp.eq.s32.totalorder %s157, 0
      %s160 = sadd.s32 %s159, 1
      %s161 = scalar_select %p158, %s159, %s160
      %p164 = pneg %p158
      %p165 = scmp.eq.s32.totalorder %s20, 2
      %p166 = por %p164, %p165
      %p167 = scmp.ne.s32.totalorder %s159, %s162
      %p168 = scmp.eq.s32.totalorder %s20, 0
      %p169 = por %p167, %p168
      %p170 = scmp.ne.s32.totalorder %s159, %s162
      %p171 = scmp.eq.s32.totalorder %s25, 2
      %p172 = por %p170, %p171
      %p173 = scmp.ne.s32.totalorder %s162, %s163
      %p174 = scmp.eq.s32.totalorder %s25, 0
      %p175 = por %p173, %p174
      %p176 = scmp.ne.s32.totalorder %s162, %s163
      %p177 = scmp.eq.s32.totalorder %s26, 2
      %p178 = por %p176, %p177
      %p180 = scmp.ne.s32.totalorder %s163, %s179
      %p181 = scmp.eq.s32.totalorder %s26, 0
      %p182 = por %p180, %p181
      %s183 = ssub.s32 2, %s20
      %s184 = ssub.s32 2, %s27
      %s185 = ssub.s32 %s183, %s184
      %p186 = scmp.eq.s32.totalorder %s185, 0
      %s188 = sadd.s32 %s187, 1
      %s189 = scalar_select %p186, %s187, %s188
      %p192 = pneg %p186
      %p193 = scmp.eq.s32.totalorder %s20, 2
      %p194 = por %p192, %p193
      %p195 = scmp.ne.s32.totalorder %s187, %s190
      %p196 = scmp.eq.s32.totalorder %s20, 0
      %p197 = por %p195, %p196
      %p198 = scmp.ne.s32.totalorder %s187, %s190
      %p199 = scmp.eq.s32.totalorder %s25, 2
      %p200 = por %p198, %p199
      %p201 = scmp.ne.s32.totalorder %s190, %s191
      %p202 = scmp.eq.s32.totalorder %s25, 0
      %p203 = por %p201, %p202
      %p204 = scmp.ne.s32.totalorder %s190, %s191
      %p205 = scmp.eq.s32.totalorder %s26, 2
      %p206 = por %p204, %p205
      %p208 = scmp.ne.s32.totalorder %s191, %s207
      %p209 = scmp.eq.s32.totalorder %s26, 0
      %p210 = por %p208, %p209
      %p211 = scmp.le.s32.totalorder 1, %s20
      %p212 = scmp.lt.s32.totalorder %s20, 4
      %p213 = pnand %p211, %p212
      %p214 = pneg %p213
      // Predicated region
      $region9: #{tpu_custom_call.1} parent=5 // pred_check
        _
      $region10: #{tpu_custom_call.1} parent=5 // pred_check_branch
        %216 = sbr.rel (%p213) target = $region12
      $region11: #{tpu_custom_call.1} parent=5 // pred_region
        %s217 = ssub.s32 %s20, 1
        // Predicated region
        $region13: #{tpu_custom_call.1} parent=11 // pred_check
          %p218 = pneg %p149
        $region14: #{tpu_custom_call.1} parent=11 // pred_check_branch
          %220 = sbr.rel (%p218) target = $region16
        $region15: #{tpu_custom_call.1} parent=11 // pred_region
          %s222 = ssub.s32 512, 512
          %223 = vsyncadd [#allocation5], %s222
          %s224 = sshll.u32 [#allocation4], 4
          %s225 = int_to_ptr.vmem [resolvable:$true] %s224
          %230 = dma.hbm_to_vmem [thread:$0]  %s4, 512, %s225, [#allocation5], 64, 64, 4
        $region16: #{tpu_custom_call.1} parent=11 // pred_fallthru
          _
      $region12: #{tpu_custom_call.1} parent=5 // pred_fallthru
        _
      %p231 = scmp.lt.s32.totalorder %s20, 3
      // Predicated region
      $region17: #{tpu_custom_call.1} parent=5 // pred_check
        %p232 = pneg %p231
      $region18: #{tpu_custom_call.1} parent=5 // pred_check_branch
        %234 = sbr.rel (%p232) target = $region20
      $region19: #{tpu_custom_call.1} parent=5 // pred_region
        // Predicated region
        $region21: #{tpu_custom_call.1} parent=19 // pred_check
          %p235 = pneg %p40
        $region22: #{tpu_custom_call.1} parent=19 // pred_check_branch
          %237 = sbr.rel (%p235) target = $region24
        $region23: #{tpu_custom_call.1} parent=19 // pred_region
          %s238 = smul.u32 4, %s20
          %p239 = scmp.lt.s32.totalorder %s238, 11
          %s240 = scalar_select %p239, %s238, 11
          %s241 = smul.addr %s240, 4
          %s242 = scalar_lea.vmem %s0, %s241
          %s243 = smul.u32 4, %s20
        $region24: #{tpu_custom_call.1} parent=19 // pred_fallthru
          _
        // Predicated region
        $region25: #{tpu_custom_call.1} parent=19 // pred_check
          %p244 = pneg %p68
        $region26: #{tpu_custom_call.1} parent=19 // pred_check_branch
          %246 = sbr.rel (%p244) target = $region28
        $region27: #{tpu_custom_call.1} parent=19 // pred_region
          %s247 = ssub.s32 2, %s20
          %s248 = smul.u32 4, %s247
          %p249 = scmp.lt.s32.totalorder %s248, 11
          %s250 = scalar_select %p249, %s248, 11
          %s251 = sadd.s32 %s250, 12
          %s252 = smul.addr %s251, 4
          %s253 = scalar_lea.vmem %s1, %s252
          %s254 = ssub.s32 2, %s20
          %s255 = smul.u32 4, %s254
        $region28: #{tpu_custom_call.1} parent=19 // pred_fallthru
          _
        // Predicated region
        $region29: #{tpu_custom_call.1} parent=19 // pred_check
          %p256 = pneg %p94
        $region30: #{tpu_custom_call.1} parent=19 // pred_check_branch
          %258 = sbr.rel (%p256) target = $region32
        $region31: #{tpu_custom_call.1} parent=19 // pred_region
          %s259 = smul.u32 4, %s20
          %p260 = scmp.lt.s32.totalorder %s259, 11
          %s261 = scalar_select %p260, %s259, 11
          %s262 = smul.addr %s261, 8
          %s263 = scalar_lea.vmem %s2, %s262
          %s264 = smul.u32 4, %s20
        $region32: #{tpu_custom_call.1} parent=19 // pred_fallthru
          _
        // Predicated region
        $region33: #{tpu_custom_call.1} parent=19 // pred_check
          %p265 = pneg %p122
        $region34: #{tpu_custom_call.1} parent=19 // pred_check_branch
          %267 = sbr.rel (%p265) target = $region36
        $region35: #{tpu_custom_call.1} parent=19 // pred_region
          %s268 = ssub.s32 2, %s20
          %s269 = smul.u32 4, %s268
          %p270 = scmp.lt.s32.totalorder %s269, 11
          %s271 = scalar_select %p270, %s269, 11
          %s272 = smul.addr %s271, 8
          %s273 = scalar_lea.vmem %s3, %s272
          %s274 = ssub.s32 2, %s20
          %s275 = smul.u32 4, %s274
        $region36: #{tpu_custom_call.1} parent=19 // pred_fallthru
          _
      $region20: #{tpu_custom_call.1} parent=5 // pred_fallthru
        _
      %p276 = scmp.le.s32.totalorder 1, %s20
      %p277 = scmp.lt.s32.totalorder %s20, 4
      %p278 = pnand %p276, %p277
      %p279 = pneg %p278
      // Predicated region
      $region37: #{tpu_custom_call.1} parent=5 // pred_check
        _
      $region38: #{tpu_custom_call.1} parent=5 // pred_check_branch
        %281 = sbr.rel (%p278) target = $region40
      $region39: #{tpu_custom_call.1} parent=5 // pred_region
        %s282 = ssub.s32 %s20, 1
        // Predicated region
        $region41: #{tpu_custom_call.1} parent=39 // pred_check
          %p283 = pneg %p149
        $region42: #{tpu_custom_call.1} parent=39 // pred_check_branch
          %285 = sbr.rel (%p283) target = $region44
        $region43: #{tpu_custom_call.1} parent=39 // pred_region
          %286 = dma.done [#allocation5], 512
        $region44: #{tpu_custom_call.1} parent=39 // pred_fallthru
          _
        %s287 = smul.u32 4, %s25
        %p288 = scmp.lt.s32.totalorder %s287, 11
        %s289 = scalar_select %p288, %s287, 11
        %s290 = smul.addr %s289, 4
        %s291 = scalar_lea.vmem %s0, %s290
        %p292 = pneg %p46
        %p293 = pneg %p43
        %s294 = ssub.s32 2, %s25
        %s295 = smul.u32 4, %s294
        %p296 = scmp.lt.s32.totalorder %s295, 11
        %s297 = scalar_select %p296, %s295, 11
        %s298 = sadd.s32 %s297, 12
        %s299 = smul.addr %s298, 4
        %s300 = scalar_lea.vmem %s1, %s299
        %p301 = pneg %p74
        %p302 = pneg %p71
        %s303 = smul.u32 4, %s25
        %p304 = scmp.lt.s32.totalorder %s303, 11
        %s305 = scalar_select %p304, %s303, 11
        %s306 = smul.addr %s305, 8
        %s307 = scalar_lea.vmem %s2, %s306
        %p308 = pneg %p100
        %p309 = pneg %p97
        %s310 = ssub.s32 2, %s25
        %s311 = smul.u32 4, %s310
        %p312 = scmp.lt.s32.totalorder %s311, 11
        %s313 = scalar_select %p312, %s311, 11
        %s314 = smul.addr %s313, 8
        %s315 = scalar_lea.vmem %s3, %s314
        %p316 = pneg %p128
        %p317 = pneg %p125
        %p318 = pneg %p149
        %p319 = pneg %p146
        %p320 = pneg %p175
        %p321 = pneg %p172
        %s322 = sand.u32 %s162, 1
        %s323 = scalar_lea.sflag [#allocation6], %s322
        %s324 = sand.u32 %s162, 1
        %s325 = smul.addr %s324, 32
        %s326 = scalar_lea.vmem [#allocation7], %s325
        %p327 = pneg %p203
        %p328 = pneg %p200
        %s329 = sand.u32 %s190, 1
        %s330 = scalar_lea.sflag [#allocation9], %s329
        %s331 = sand.u32 %s190, 1
        %s332 = smul.addr %s331, 32
        %s333 = scalar_lea.vmem [#allocation8], %s332
        %s334 = smul.u32 4, %s25
        %p335 = scmp.lt.s32.totalorder %s334, 11
        %s336 = scalar_select %p335, %s334, 11
        %s337 = smul.addr %s336, 4
        %s338 = scalar_lea.vmem %s0, %s337
        %s339 = smul.u32 4, %s25
        %s340 = ssub.s32 2, %s25
        %s341 = smul.u32 4, %s340
        %p342 = scmp.lt.s32.totalorder %s341, 11
        %s343 = scalar_select %p342, %s341, 11
        %s344 = sadd.s32 %s343, 12
        %s345 = smul.addr %s344, 4
        %s346 = scalar_lea.vmem %s1, %s345
        %s347 = ssub.s32 2, %s25
        %s348 = smul.u32 4, %s347
        %s349 = smul.u32 4, %s25
        %p350 = scmp.lt.s32.totalorder %s349, 11
        %s351 = scalar_select %p350, %s349, 11
        %s352 = smul.addr %s351, 8
        %s353 = scalar_lea.vmem %s2, %s352
        %s354 = smul.u32 4, %s25
        %s355 = ssub.s32 2, %s25
        %s356 = smul.u32 4, %s355
        %p357 = scmp.lt.s32.totalorder %s356, 11
        %s358 = scalar_select %p357, %s356, 11
        %s359 = smul.addr %s358, 8
        %s360 = scalar_lea.vmem %s3, %s359
        %s361 = ssub.s32 2, %s25
        %s362 = smul.u32 4, %s361
        %s363 = smul.u32 4, %s25
        %s364 = ssub.s32 2, %s25
        %s365 = smul.u32 4, %s364
        %p367 = scmp.eq.s32.totalorder %s25, 0
        // Predicated region
        $region45: #{tpu_custom_call.1} parent=39 // pred_check
          %p368 = pneg %p367
        $region46: #{tpu_custom_call.1} parent=39 // pred_check_branch
          %370 = sbr.rel (%p368) target = $region48
        $region47: #{tpu_custom_call.1} parent=39 // pred_region
          %vm371 = vcmask 257024
          %372 = vst.msk [vmem:[#allocation2] sm:$0xf] %vm371, 0
          %373 = vst.msk [vmem:[#allocation2 + $0x4] sm:$0xf] %vm371, 0
          %vm374 = vcmask 261120
          %375 = vst.msk [vmem:[#allocation3] sm:$0xff] %vm374, 0.0
          %376 = vst.msk [vmem:[#allocation3 + $0x8] sm:$0xff] %vm374, 0.0
        $region48: #{tpu_custom_call.1} parent=39 // pred_fallthru
          _
        %v377 = vld [vmem:[#allocation4] sm:$0xf]
        %v378 = vld [vmem:[#allocation4 + $0x4] sm:$0xf]
        %v379 = vld [vmem:[#allocation4 + $0x8] sm:$0xf]
        %v380 = vld [vmem:[#allocation4 + $0xc] sm:$0xf]
        %s381 = scalar_lea.vmem [#allocation4], 16
        %v382 = vld [vmem:[%s381] sm:$0xf]
        %v383 = vld [vmem:[%s381 + $0x4] sm:$0xf]
        %v384 = vld [vmem:[%s381 + $0x8] sm:$0xf]
        %v385 = vld [vmem:[%s381 + $0xc] sm:$0xf]
        %v386 = vld [vmem:[#allocation2] sm:$0xf]
        %v387 = vld [vmem:[#allocation3] sm:$0xff]
        %s388 = scalar_lea.vmem [#allocation2], 4
        %v389 = vld [vmem:[%s388] sm:$0xf]
        %s390 = scalar_lea.vmem [#allocation3], 8
        %v391 = vld [vmem:[%s390] sm:$0xff]
        %v392 = vld [vmem:[%s338] sm:$0xf]
        %v393 = vunpack.c.l.bf16 %v392
        %v398 = vunpack.c.l.b16 %v377
        %v399 = vunpack.c.l.b16 %v378
        %v400 = vunpack.c.l.b16 %v379
        %v401 = vunpack.c.l.b16 %v380
        %v402 = vpack.c.b16 %v399, %v398
        %v403 = vpack.c.b16 %v401, %v400
        %vm406 = vcmask 261120
        %v408 = vsel %vm406, %v386, 0
        %410 = vmatprep.subr.bf16.mxu0 0
        %411 = vmatpush1.bf16.msra.mxu0 %v402
        %412 = vmatprep.subr.bf16.mxu0 0
        %413 = vmatpush1.bf16.msra.mxu0 %v403
        %414 = vmatprep.subr.bf16.mxu0 0
        %415 = vmatpush1.bf16.msra.mxu0 0
        %416 = vmatprep.subr.bf16.mxu0 0
        %417 = vmatpush1.bf16.msra.mxu0 0
        %418 = vmatprep.subr.bf16.mxu0 0
        %419 = vmatpush1.bf16.msra.mxu0 0
        %420 = vmatprep.subr.bf16.mxu0 0
        %421 = vmatpush1.bf16.msra.mxu0 0
        %422 = vmatprep.subr.bf16.mxu0 0
        %423 = vmatpush1.bf16.msra.mxu0 0
        %424 = vmatprep.subr.bf16.mxu0 0
        %425 = vmatpush1.bf16.msra.mxu0 0
        %426 = vmatprep.subr.bf16.mxu0 0
        %427 = vmatpush1.bf16.msra.mxu0 0
        %428 = vmatprep.subr.bf16.mxu0 0
        %429 = vmatpush1.bf16.msra.mxu0 0
        %430 = vmatprep.subr.bf16.mxu0 0
        %431 = vmatpush1.bf16.msra.mxu0 0
        %432 = vmatprep.subr.bf16.mxu0 0
        %433 = vmatpush1.bf16.msra.mxu0 0
        %434 = vmatprep.subr.bf16.mxu0 0
        %435 = vmatpush1.bf16.msra.mxu0 0
        %436 = vmatprep.subr.bf16.mxu0 0
        %437 = vmatpush1.bf16.msra.mxu0 0
        %438 = vmatprep.subr.bf16.mxu0 0
        %439 = vmatpush1.bf16.msra.mxu0 0
        %440 = vmatprep.subr.bf16.mxu0 0
        %441 = vmatpush1.bf16.msra.mxu0 0
        %442 = vmatprep.mubr.bf16.mxu0 0
        %443 = vmatmul.mubr.bf16.gmra.mrb[0].mxu0 %v408
        %v444 = vpop.f32.mrb[0].mxu0
        %v445 = vadd.f32 0.0, %v444
        %v446 = vpop.f32.mrb[0].mxu0
        %v447 = vpop.f32.mrb[0].mxu0
        %v448 = vpop.f32.mrb[0].mxu0
        %449 = vdwg.mxu0
        %v450 = vadd.f32 %v393, %v445
        %s451 = scalar_lea.vmem %s346, 12
        %v452 = vld [vmem:[%s451] sm:$0xf]
        %v453 = vunpack.c.l.bf16 %v452
        %v458 = vunpack.c.l.b16 %v382
        %v459 = vunpack.c.l.b16 %v383
        %v460 = vunpack.c.l.b16 %v384
        %v461 = vunpack.c.l.b16 %v385
        %v462 = vpack.c.b16 %v459, %v458
        %v463 = vpack.c.b16 %v461, %v460
        %v467 = vsel %vm406, %v389, 0
        %469 = vmatprep.subr.bf16.mxu0 0
        %470 = vmatpush1.bf16.msra.mxu0 %v462
        %471 = vmatprep.subr.bf16.mxu0 0
        %472 = vmatpush1.bf16.msra.mxu0 %v463
        %473 = vmatprep.subr.bf16.mxu0 0
        %474 = vmatpush1.bf16.msra.mxu0 0
        %475 = vmatprep.subr.bf16.mxu0 0
        %476 = vmatpush1.bf16.msra.mxu0 0
        %477 = vmatprep.subr.bf16.mxu0 0
        %478 = vmatpush1.bf16.msra.mxu0 0
        %479 = vmatprep.subr.bf16.mxu0 0
        %480 = vmatpush1.bf16.msra.mxu0 0
        %481 = vmatprep.subr.bf16.mxu0 0
        %482 = vmatpush1.bf16.msra.mxu0 0
        %483 = vmatprep.subr.bf16.mxu0 0
        %484 = vmatpush1.bf16.msra.mxu0 0
        %485 = vmatprep.subr.bf16.mxu0 0
        %486 = vmatpush1.bf16.msra.mxu0 0
        %487 = vmatprep.subr.bf16.mxu0 0
        %488 = vmatpush1.bf16.msra.mxu0 0
        %489 = vmatprep.subr.bf16.mxu0 0
        %490 = vmatpush1.bf16.msra.mxu0 0
        %491 = vmatprep.subr.bf16.mxu0 0
        %492 = vmatpush1.bf16.msra.mxu0 0
        %493 = vmatprep.subr.bf16.mxu0 0
        %494 = vmatpush1.bf16.msra.mxu0 0
        %495 = vmatprep.subr.bf16.mxu0 0
        %496 = vmatpush1.bf16.msra.mxu0 0
        %497 = vmatprep.subr.bf16.mxu0 0
        %498 = vmatpush1.bf16.msra.mxu0 0
        %499 = vmatprep.subr.bf16.mxu0 0
        %500 = vmatpush1.bf16.msra.mxu0 0
        %501 = vmatprep.mubr.bf16.mxu0 0
        %502 = vmatmul.mubr.bf16.gmra.mrb[0].mxu0 %v467
        %v503 = vpop.f32.mrb[0].mxu0
        %v504 = vadd.f32 0.0, %v503
        %v505 = vpop.f32.mrb[0].mxu0
        %v506 = vpop.f32.mrb[0].mxu0
        %v507 = vpop.f32.mrb[0].mxu0
        %508 = vdwg.mxu0
        %v509 = vadd.f32 %v453, %v504
        %v510 = vxor.u32 %v450, 2147483648
        %v511 = vmul.f32 %v510, 1.442695
        %v512 = vpow.pop %v511
        %v513 = vadd.f32 %v512, 1.0
        %v514 = vrcp.pop %v513
        %v515 = vmul.f32 1.0, %v514
        %v516 = vtanh.pop %v450
        %v517 = vxor.u32 %v509, 2147483648
        %v518 = vmul.f32 %v517, 1.442695
        %v519 = vpow.pop %v518
        %v520 = vadd.f32 %v519, 1.0
        %v521 = vrcp.pop %v520
        %v522 = vmul.f32 1.0, %v521
        %v523 = vtanh.pop %v509
        %v524 = vld [vmem:[%s353] sm:$0xff]
        %s525 = scalar_lea.vmem %s360, 24
        %v526 = vld [vmem:[%s525] sm:$0xff]
        %528 = vrot.lane.b32.xlu0 %v387, 32
        %v529 = vpop.permute.xlu0 %528
        %v531 = vmul.f32 %v515, %v529
        %533 = vrot.lane.b32.xlu0 %v516, 32
        %v534 = vpop.permute.xlu0 %533
        %v536 = vmul.f32 %v515, %v534
        %538 = vrot.lane.b32.xlu0 %v536, 32
        %v539 = vpop.permute.xlu0 %538
        %v541 = vadd.f32 %v531, %v539
        %543 = vset.pattern.permute.xlu0 0
        %544 = vperm.xlu0 %543, %v524
        %v545 = vpop.permute.xlu0 %544
        %v547 = vmul.f32 %v541, %v545
        %v548 = vtanh.pop %v547
        %550 = vrot.lane.b32.xlu0 %v548, 32
        %v551 = vpop.permute.xlu0 %550
        %v553 = vmul.f32 %v515, %v551
        %v554 = vmul.f32 %v553, %v545
        %556 = vrot.lane.b32.xlu0 %v391, 32
        %v557 = vpop.permute.xlu0 %556
        %v559 = vmul.f32 %v522, %v557
        %561 = vrot.lane.b32.xlu0 %v523, 32
        %v562 = vpop.permute.xlu0 %561
        %v564 = vmul.f32 %v522, %v562
        %566 = vrot.lane.b32.xlu0 %v564, 32
        %v567 = vpop.permute.xlu0 %566
        %v569 = vadd.f32 %v559, %v567
        %571 = vset.pattern.permute.xlu0 0
        %572 = vperm.xlu0 %571, %v526
        %v573 = vpop.permute.xlu0 %572
        %v575 = vmul.f32 %v569, %v573
        %v576 = vtanh.pop %v575
        %578 = vrot.lane.b32.xlu0 %v576, 32
        %v579 = vpop.permute.xlu0 %578
        %v581 = vmul.f32 %v522, %v579
        %v582 = vmul.f32 %v581, %v573
        %584 = vrot.lane.b32.xlu0 %v554, 64
        %v585 = vpop.permute.xlu0 %584
        %587 = vst.msk [vmem:[%s326] sm:$0xff] %vm406, %v585
        %589 = vrot.lane.b32.xlu0 %v582, 64
        %v590 = vpop.permute.xlu0 %589
        %s592 = scalar_lea.vmem %s333, 24 [#allocation8]
        %593 = vst.msk [vmem:[%s592] sm:$0xff] %vm406, %v590
        %v594 = vpack.c.bf16 %v554, %v554
        %v595 = vpack.c.bf16 %v582, %v582
        %s596 = scalar_lea.vmem %s338, 4
        %v597 = vld [vmem:[%s596] sm:$0xf]
        %v598 = vunpack.c.l.bf16 %v597
        %600 = vrot.lane.b32.xlu0 %v594, 64
        %v601 = vpop.permute.xlu0 %600
        %v603 = vsel %vm406, %v601, 0
        %605 = vmatprep.subr.bf16.mxu0 0
        %606 = vmatpush1.bf16.msra.mxu0 %v402
        %607 = vmatprep.subr.bf16.mxu0 0
        %608 = vmatpush1.bf16.msra.mxu0 %v403
        %609 = vmatprep.subr.bf16.mxu0 0
        %610 = vmatpush1.bf16.msra.mxu0 0
        %611 = vmatprep.subr.bf16.mxu0 0
        %612 = vmatpush1.bf16.msra.mxu0 0
        %613 = vmatprep.subr.bf16.mxu0 0
        %614 = vmatpush1.bf16.msra.mxu0 0
        %615 = vmatprep.subr.bf16.mxu0 0
        %616 = vmatpush1.bf16.msra.mxu0 0
        %617 = vmatprep.subr.bf16.mxu0 0
        %618 = vmatpush1.bf16.msra.mxu0 0
        %619 = vmatprep.subr.bf16.mxu0 0
        %620 = vmatpush1.bf16.msra.mxu0 0
        %621 = vmatprep.subr.bf16.mxu0 0
        %622 = vmatpush1.bf16.msra.mxu0 0
        %623 = vmatprep.subr.bf16.mxu0 0
        %624 = vmatpush1.bf16.msra.mxu0 0
        %625 = vmatprep.subr.bf16.mxu0 0
        %626 = vmatpush1.bf16.msra.mxu0 0
        %627 = vmatprep.subr.bf16.mxu0 0
        %628 = vmatpush1.bf16.msra.mxu0 0
        %629 = vmatprep.subr.bf16.mxu0 0
        %630 = vmatpush1.bf16.msra.mxu0 0
        %631 = vmatprep.subr.bf16.mxu0 0
        %632 = vmatpush1.bf16.msra.mxu0 0
        %633 = vmatprep.subr.bf16.mxu0 0
        %634 = vmatpush1.bf16.msra.mxu0 0
        %635 = vmatprep.subr.bf16.mxu0 0
        %636 = vmatpush1.bf16.msra.mxu0 0
        %637 = vmatprep.mubr.bf16.mxu0 0
        %638 = vmatmul.mubr.bf16.gmra.mrb[0].mxu0 %v603
        %v639 = vpop.f32.mrb[0].mxu0
        %v640 = vadd.f32 0.0, %v639
        %v641 = vpop.f32.mrb[0].mxu0
        %v642 = vpop.f32.mrb[0].mxu0
        %v643 = vpop.f32.mrb[0].mxu0
        %644 = vdwg.mxu0
        %v645 = vadd.f32 %v598, %v640
        %s646 = scalar_lea.vmem %s346, 8
        %v647 = vld [vmem:[%s646] sm:$0xf]
        %v648 = vunpack.c.l.bf16 %v647
        %650 = vrot.lane.b32.xlu0 %v595, 64
        %v651 = vpop.permute.xlu0 %650
        %v653 = vsel %vm406, %v651, 0
        %655 = vmatprep.subr.bf16.mxu0 0
        %656 = vmatpush1.bf16.msra.mxu0 %v462
        %657 = vmatprep.subr.bf16.mxu0 0
        %658 = vmatpush1.bf16.msra.mxu0 %v463
        %659 = vmatprep.subr.bf16.mxu0 0
        %660 = vmatpush1.bf16.msra.mxu0 0
        %661 = vmatprep.subr.bf16.mxu0 0
        %662 = vmatpush1.bf16.msra.mxu0 0
        %663 = vmatprep.subr.bf16.mxu0 0
        %664 = vmatpush1.bf16.msra.mxu0 0
        %665 = vmatprep.subr.bf16.mxu0 0
        %666 = vmatpush1.bf16.msra.mxu0 0
        %667 = vmatprep.subr.bf16.mxu0 0
        %668 = vmatpush1.bf16.msra.mxu0 0
        %669 = vmatprep.subr.bf16.mxu0 0
        %670 = vmatpush1.bf16.msra.mxu0 0
        %671 = vmatprep.subr.bf16.mxu0 0
        %672 = vmatpush1.bf16.msra.mxu0 0
        %673 = vmatprep.subr.bf16.mxu0 0
        %674 = vmatpush1.bf16.msra.mxu0 0
        %675 = vmatprep.subr.bf16.mxu0 0
        %676 = vmatpush1.bf16.msra.mxu0 0
        %677 = vmatprep.subr.bf16.mxu0 0
        %678 = vmatpush1.bf16.msra.mxu0 0
        %679 = vmatprep.subr.bf16.mxu0 0
        %680 = vmatpush1.bf16.msra.mxu0 0
        %681 = vmatprep.subr.bf16.mxu0 0
        %682 = vmatpush1.bf16.msra.mxu0 0
        %683 = vmatprep.subr.bf16.mxu0 0
        %684 = vmatpush1.bf16.msra.mxu0 0
        %685 = vmatprep.subr.bf16.mxu0 0
        %686 = vmatpush1.bf16.msra.mxu0 0
        %687 = vmatprep.mubr.bf16.mxu0 0
        %688 = vmatmul.mubr.bf16.gmra.mrb[0].mxu0 %v653
        %v689 = vpop.f32.mrb[0].mxu0
        %v690 = vadd.f32 0.0, %v689
        %v691 = vpop.f32.mrb[0].mxu0
        %v692 = vpop.f32.mrb[0].mxu0
        %v693 = vpop.f32.mrb[0].mxu0
        %694 = vdwg.mxu0
        %v695 = vadd.f32 %v648, %v690
        %v696 = vxor.u32 %v645, 2147483648
        %v697 = vmul.f32 %v696, 1.442695
        %v698 = vpow.pop %v697
        %v699 = vadd.f32 %v698, 1.0
        %v700 = vrcp.pop %v699
        %v701 = vmul.f32 1.0, %v700
        %v702 = vtanh.pop %v645
        %v703 = vxor.u32 %v695, 2147483648
        %v704 = vmul.f32 %v703, 1.442695
        %v705 = vpow.pop %v704
        %v706 = vadd.f32 %v705, 1.0
        %v707 = vrcp.pop %v706
        %v708 = vmul.f32 1.0, %v707
        %v709 = vtanh.pop %v695
        %s710 = scalar_lea.vmem %s353, 8
        %v711 = vld [vmem:[%s710] sm:$0xff]
        %s712 = scalar_lea.vmem %s360, 16
        %v713 = vld [vmem:[%s712] sm:$0xff]
        %v714 = vmul.f32 %v701, %v547
        %716 = vrot.lane.b32.xlu0 %v702, 32
        %v717 = vpop.permute.xlu0 %716
        %v719 = vmul.f32 %v701, %v717
        %721 = vrot.lane.b32.xlu0 %v719, 32
        %v722 = vpop.permute.xlu0 %721
        %v724 = vadd.f32 %v714, %v722
        %726 = vset.pattern.permute.xlu0 0
        %727 = vperm.xlu0 %726, %v711
        %v728 = vpop.permute.xlu0 %727
        %v730 = vmul.f32 %v724, %v728
        %v731 = vtanh.pop %v730
        %733 = vrot.lane.b32.xlu0 %v731, 32
        %v734 = vpop.permute.xlu0 %733
        %v736 = vmul.f32 %v701, %v734
        %v737 = vmul.f32 %v736, %v728
        %v738 = vmul.f32 %v708, %v575
        %740 = vrot.lane.b32.xlu0 %v709, 32
        %v741 = vpop.permute.xlu0 %740
        %v743 = vmul.f32 %v708, %v741
        %745 = vrot.lane.b32.xlu0 %v743, 32
        %v746 = vpop.permute.xlu0 %745
        %v748 = vadd.f32 %v738, %v746
        %750 = vset.pattern.permute.xlu0 0
        %751 = vperm.xlu0 %750, %v713
        %v752 = vpop.permute.xlu0 %751
        %v754 = vmul.f32 %v748, %v752
        %v755 = vtanh.pop %v754
        %757 = vrot.lane.b32.xlu0 %v755, 32
        %v758 = vpop.permute.xlu0 %757
        %v760 = vmul.f32 %v708, %v758
        %v761 = vmul.f32 %v760, %v752
        %763 = vrot.lane.b32.xlu0 %v737, 64
        %v764 = vpop.permute.xlu0 %763
        %s766 = scalar_lea.vmem %s326, 8 [#allocation7]
        %767 = vst.msk [vmem:[%s766] sm:$0xff] %vm406, %v764
        %769 = vrot.lane.b32.xlu0 %v761, 64
        %v770 = vpop.permute.xlu0 %769
        %s772 = scalar_lea.vmem %s333, 16 [#allocation8]
        %773 = vst.msk [vmem:[%s772] sm:$0xff] %vm406, %v770
        %v774 = vpack.c.bf16 %v737, %v737
        %v775 = vpack.c.bf16 %v761, %v761
        %s776 = scalar_lea.vmem %s338, 8
        %v777 = vld [vmem:[%s776] sm:$0xf]
        %v778 = vunpack.c.l.bf16 %v777
        %780 = vrot.lane.b32.xlu0 %v774, 64
        %v781 = vpop.permute.xlu0 %780
        %v783 = vsel %vm406, %v781, 0
        %785 = vmatprep.subr.bf16.mxu0 0
        %786 = vmatpush1.bf16.msra.mxu0 %v402
        %787 = vmatprep.subr.bf16.mxu0 0
        %788 = vmatpush1.bf16.msra.mxu0 %v403
        %789 = vmatprep.subr.bf16.mxu0 0
        %790 = vmatpush1.bf16.msra.mxu0 0
        %791 = vmatprep.subr.bf16.mxu0 0
        %792 = vmatpush1.bf16.msra.mxu0 0
        %793 = vmatprep.subr.bf16.mxu0 0
        %794 = vmatpush1.bf16.msra.mxu0 0
        %795 = vmatprep.subr.bf16.mxu0 0
        %796 = vmatpush1.bf16.msra.mxu0 0
        %797 = vmatprep.subr.bf16.mxu0 0
        %798 = vmatpush1.bf16.msra.mxu0 0
        %799 = vmatprep.subr.bf16.mxu0 0
        %800 = vmatpush1.bf16.msra.mxu0 0
        %801 = vmatprep.subr.bf16.mxu0 0
        %802 = vmatpush1.bf16.msra.mxu0 0
        %803 = vmatprep.subr.bf16.mxu0 0
        %804 = vmatpush1.bf16.msra.mxu0 0
        %805 = vmatprep.subr.bf16.mxu0 0
        %806 = vmatpush1.bf16.msra.mxu0 0
        %807 = vmatprep.subr.bf16.mxu0 0
        %808 = vmatpush1.bf16.msra.mxu0 0
        %809 = vmatprep.subr.bf16.mxu0 0
        %810 = vmatpush1.bf16.msra.mxu0 0
        %811 = vmatprep.subr.bf16.mxu0 0
        %812 = vmatpush1.bf16.msra.mxu0 0
        %813 = vmatprep.subr.bf16.mxu0 0
        %814 = vmatpush1.bf16.msra.mxu0 0
        %815 = vmatprep.subr.bf16.mxu0 0
        %816 = vmatpush1.bf16.msra.mxu0 0
        %817 = vmatprep.mubr.bf16.mxu0 0
        %818 = vmatmul.mubr.bf16.gmra.mrb[0].mxu0 %v783
        %v819 = vpop.f32.mrb[0].mxu0
        %v820 = vadd.f32 0.0, %v819
        %v821 = vpop.f32.mrb[0].mxu0
        %v822 = vpop.f32.mrb[0].mxu0
        %v823 = vpop.f32.mrb[0].mxu0
        %824 = vdwg.mxu0
        %v825 = vadd.f32 %v778, %v820
        %s826 = scalar_lea.vmem %s346, 4
        %v827 = vld [vmem:[%s826] sm:$0xf]
        %v828 = vunpack.c.l.bf16 %v827
        %830 = vrot.lane.b32.xlu0 %v775, 64
        %v831 = vpop.permute.xlu0 %830
        %v833 = vsel %vm406, %v831, 0
        %835 = vmatprep.subr.bf16.mxu0 0
        %836 = vmatpush1.bf16.msra.mxu0 %v462
        %837 = vmatprep.subr.bf16.mxu0 0
        %838 = vmatpush1.bf16.msra.mxu0 %v463
        %839 = vmatprep.subr.bf16.mxu0 0
        %840 = vmatpush1.bf16.msra.mxu0 0
        %841 = vmatprep.subr.bf16.mxu0 0
        %842 = vmatpush1.bf16.msra.mxu0 0
        %843 = vmatprep.subr.bf16.mxu0 0
        %844 = vmatpush1.bf16.msra.mxu0 0
        %845 = vmatprep.subr.bf16.mxu0 0
        %846 = vmatpush1.bf16.msra.mxu0 0
        %847 = vmatprep.subr.bf16.mxu0 0
        %848 = vmatpush1.bf16.msra.mxu0 0
        %849 = vmatprep.subr.bf16.mxu0 0
        %850 = vmatpush1.bf16.msra.mxu0 0
        %851 = vmatprep.subr.bf16.mxu0 0
        %852 = vmatpush1.bf16.msra.mxu0 0
        %853 = vmatprep.subr.bf16.mxu0 0
        %854 = vmatpush1.bf16.msra.mxu0 0
        %855 = vmatprep.subr.bf16.mxu0 0
        %856 = vmatpush1.bf16.msra.mxu0 0
        %857 = vmatprep.subr.bf16.mxu0 0
        %858 = vmatpush1.bf16.msra.mxu0 0
        %859 = vmatprep.subr.bf16.mxu0 0
        %860 = vmatpush1.bf16.msra.mxu0 0
        %861 = vmatprep.subr.bf16.mxu0 0
        %862 = vmatpush1.bf16.msra.mxu0 0
        %863 = vmatprep.subr.bf16.mxu0 0
        %864 = vmatpush1.bf16.msra.mxu0 0
        %865 = vmatprep.subr.bf16.mxu0 0
        %866 = vmatpush1.bf16.msra.mxu0 0
        %867 = vmatprep.mubr.bf16.mxu0 0
        %868 = vmatmul.mubr.bf16.gmra.mrb[0].mxu0 %v833
        %v869 = vpop.f32.mrb[0].mxu0
        %v870 = vadd.f32 0.0, %v869
        %v871 = vpop.f32.mrb[0].mxu0
        %v872 = vpop.f32.mrb[0].mxu0
        %v873 = vpop.f32.mrb[0].mxu0
        %874 = vdwg.mxu0
        %v875 = vadd.f32 %v828, %v870
        %v876 = vxor.u32 %v825, 2147483648
        %v877 = vmul.f32 %v876, 1.442695
        %v878 = vpow.pop %v877
        %v879 = vadd.f32 %v878, 1.0
        %v880 = vrcp.pop %v879
        %v881 = vmul.f32 1.0, %v880
        %v882 = vtanh.pop %v825
        %v883 = vxor.u32 %v875, 2147483648
        %v884 = vmul.f32 %v883, 1.442695
        %v885 = vpow.pop %v884
        %v886 = vadd.f32 %v885, 1.0
        %v887 = vrcp.pop %v886
        %v888 = vmul.f32 1.0, %v887
        %v889 = vtanh.pop %v875
        %s890 = scalar_lea.vmem %s353, 16
        %v891 = vld [vmem:[%s890] sm:$0xff]
        %s892 = scalar_lea.vmem %s360, 8
        %v893 = vld [vmem:[%s892] sm:$0xff]
        %v894 = vmul.f32 %v881, %v730
        %896 = vrot.lane.b32.xlu0 %v882, 32
        %v897 = vpop.permute.xlu0 %896
        %v899 = vmul.f32 %v881, %v897
        %901 = vrot.lane.b32.xlu0 %v899, 32
        %v902 = vpop.permute.xlu0 %901
        %v904 = vadd.f32 %v894, %v902
        %906 = vset.pattern.permute.xlu0 0
        %907 = vperm.xlu0 %906, %v891
        %v908 = vpop.permute.xlu0 %907
        %v910 = vmul.f32 %v904, %v908
        %v911 = vtanh.pop %v910
        %913 = vrot.lane.b32.xlu0 %v911, 32
        %v914 = vpop.permute.xlu0 %913
        %v916 = vmul.f32 %v881, %v914
        %v917 = vmul.f32 %v916, %v908
        %v918 = vmul.f32 %v888, %v754
        %920 = vrot.lane.b32.xlu0 %v889, 32
        %v921 = vpop.permute.xlu0 %920
        %v923 = vmul.f32 %v888, %v921
        %925 = vrot.lane.b32.xlu0 %v923, 32
        %v926 = vpop.permute.xlu0 %925
        %v928 = vadd.f32 %v918, %v926
        %930 = vset.pattern.permute.xlu0 0
        %931 = vperm.xlu0 %930, %v893
        %v932 = vpop.permute.xlu0 %931
        %v934 = vmul.f32 %v928, %v932
        %v935 = vtanh.pop %v934
        %937 = vrot.lane.b32.xlu0 %v935, 32
        %v938 = vpop.permute.xlu0 %937
        %v940 = vmul.f32 %v888, %v938
        %v941 = vmul.f32 %v940, %v932
        %943 = vrot.lane.b32.xlu0 %v917, 64
        %v944 = vpop.permute.xlu0 %943
        %s946 = scalar_lea.vmem %s326, 16 [#allocation7]
        %947 = vst.msk [vmem:[%s946] sm:$0xff] %vm406, %v944
        %949 = vrot.lane.b32.xlu0 %v941, 64
        %v950 = vpop.permute.xlu0 %949
        %s952 = scalar_lea.vmem %s333, 8 [#allocation8]
        %953 = vst.msk [vmem:[%s952] sm:$0xff] %vm406, %v950
        %v954 = vpack.c.bf16 %v917, %v917
        %v955 = vpack.c.bf16 %v941, %v941
        %s956 = scalar_lea.vmem %s338, 12
        %v957 = vld [vmem:[%s956] sm:$0xf]
        %v958 = vunpack.c.l.bf16 %v957
        %960 = vrot.lane.b32.xlu0 %v954, 64
        %v961 = vpop.permute.xlu0 %960
        %v963 = vsel %vm406, %v961, 0
        %965 = vmatprep.subr.bf16.mxu0 0
        %966 = vmatpush1.bf16.msra.mxu0 %v402
        %967 = vmatprep.subr.bf16.mxu0 0
        %968 = vmatpush1.bf16.msra.mxu0 %v403
        %969 = vmatprep.subr.bf16.mxu0 0
        %970 = vmatpush1.bf16.msra.mxu0 0
        %971 = vmatprep.subr.bf16.mxu0 0
        %972 = vmatpush1.bf16.msra.mxu0 0
        %973 = vmatprep.subr.bf16.mxu0 0
        %974 = vmatpush1.bf16.msra.mxu0 0
        %975 = vmatprep.subr.bf16.mxu0 0
        %976 = vmatpush1.bf16.msra.mxu0 0
        %977 = vmatprep.subr.bf16.mxu0 0
        %978 = vmatpush1.bf16.msra.mxu0 0
        %979 = vmatprep.subr.bf16.mxu0 0
        %980 = vmatpush1.bf16.msra.mxu0 0
        %981 = vmatprep.subr.bf16.mxu0 0
        %982 = vmatpush1.bf16.msra.mxu0 0
        %983 = vmatprep.subr.bf16.mxu0 0
        %984 = vmatpush1.bf16.msra.mxu0 0
        %985 = vmatprep.subr.bf16.mxu0 0
        %986 = vmatpush1.bf16.msra.mxu0 0
        %987 = vmatprep.subr.bf16.mxu0 0
        %988 = vmatpush1.bf16.msra.mxu0 0
        %989 = vmatprep.subr.bf16.mxu0 0
        %990 = vmatpush1.bf16.msra.mxu0 0
        %991 = vmatprep.subr.bf16.mxu0 0
        %992 = vmatpush1.bf16.msra.mxu0 0
        %993 = vmatprep.subr.bf16.mxu0 0
        %994 = vmatpush1.bf16.msra.mxu0 0
        %995 = vmatprep.subr.bf16.mxu0 0
        %996 = vmatpush1.bf16.msra.mxu0 0
        %997 = vmatprep.mubr.bf16.mxu0 0
        %998 = vmatmul.mubr.bf16.gmra.mrb[0].mxu0 %v963
        %v999 = vpop.f32.mrb[0].mxu0
        %v1000 = vadd.f32 0.0, %v999
        %v1001 = vpop.f32.mrb[0].mxu0
        %v1002 = vpop.f32.mrb[0].mxu0
        %v1003 = vpop.f32.mrb[0].mxu0
        %1004 = vdwg.mxu0
        %v1005 = vadd.f32 %v958, %v1000
        %v1006 = vld [vmem:[%s346] sm:$0xf]
        %v1007 = vunpack.c.l.bf16 %v1006
        %1009 = vrot.lane.b32.xlu0 %v955, 64
        %v1010 = vpop.permute.xlu0 %1009
        %v1012 = vsel %vm406, %v1010, 0
        %1014 = vmatprep.subr.bf16.mxu0 0
        %1015 = vmatpush1.bf16.msra.mxu0 %v462
        %1016 = vmatprep.subr.bf16.mxu0 0
        %1017 = vmatpush1.bf16.msra.mxu0 %v463
        %1018 = vmatprep.subr.bf16.mxu0 0
        %1019 = vmatpush1.bf16.msra.mxu0 0
        %1020 = vmatprep.subr.bf16.mxu0 0
        %1021 = vmatpush1.bf16.msra.mxu0 0
        %1022 = vmatprep.subr.bf16.mxu0 0
        %1023 = vmatpush1.bf16.msra.mxu0 0
        %1024 = vmatprep.subr.bf16.mxu0 0
        %1025 = vmatpush1.bf16.msra.mxu0 0
        %1026 = vmatprep.subr.bf16.mxu0 0
        %1027 = vmatpush1.bf16.msra.mxu0 0
        %1028 = vmatprep.subr.bf16.mxu0 0
        %1029 = vmatpush1.bf16.msra.mxu0 0
        %1030 = vmatprep.subr.bf16.mxu0 0
        %1031 = vmatpush1.bf16.msra.mxu0 0
        %1032 = vmatprep.subr.bf16.mxu0 0
        %1033 = vmatpush1.bf16.msra.mxu0 0
        %1034 = vmatprep.subr.bf16.mxu0 0
        %1035 = vmatpush1.bf16.msra.mxu0 0
        %1036 = vmatprep.subr.bf16.mxu0 0
        %1037 = vmatpush1.bf16.msra.mxu0 0
        %1038 = vmatprep.subr.bf16.mxu0 0
        %1039 = vmatpush1.bf16.msra.mxu0 0
        %1040 = vmatprep.subr.bf16.mxu0 0
        %1041 = vmatpush1.bf16.msra.mxu0 0
        %1042 = vmatprep.subr.bf16.mxu0 0
        %1043 = vmatpush1.bf16.msra.mxu0 0
        %1044 = vmatprep.subr.bf16.mxu0 0
        %1045 = vmatpush1.bf16.msra.mxu0 0
        %1046 = vmatprep.mubr.bf16.mxu0 0
        %1047 = vmatmul.mubr.bf16.gmra.mrb[0].mxu0 %v1012
        %v1048 = vpop.f32.mrb[0].mxu0
        %v1049 = vadd.f32 0.0, %v1048
        %v1050 = vpop.f32.mrb[0].mxu0
        %v1051 = vpop.f32.mrb[0].mxu0
        %v1052 = vpop.f32.mrb[0].mxu0
        %1053 = vdwg.mxu0
        %v1054 = vadd.f32 %v1007, %v1049
        %v1055 = vxor.u32 %v1005, 2147483648
        %v1056 = vmul.f32 %v1055, 1.442695
        %v1057 = vpow.pop %v1056
        %v1058 = vadd.f32 %v1057, 1.0
        %v1059 = vrcp.pop %v1058
        %v1060 = vmul.f32 1.0, %v1059
        %v1061 = vtanh.pop %v1005
        %v1062 = vxor.u32 %v1054, 2147483648
        %v1063 = vmul.f32 %v1062, 1.442695
        %v1064 = vpow.pop %v1063
        %v1065 = vadd.f32 %v1064, 1.0
        %v1066 = vrcp.pop %v1065
        %v1067 = vmul.f32 1.0, %v1066
        %v1068 = vtanh.pop %v1054
        %s1069 = scalar_lea.vmem %s353, 24
        %v1070 = vld [vmem:[%s1069] sm:$0xff]
        %v1071 = vld [vmem:[%s360] sm:$0xff]
        %v1072 = vmul.f32 %v1060, %v910
        %1074 = vrot.lane.b32.xlu0 %v1061, 32
        %v1075 = vpop.permute.xlu0 %1074
        %v1077 = vmul.f32 %v1060, %v1075
        %1079 = vrot.lane.b32.xlu0 %v1077, 32
        %v1080 = vpop.permute.xlu0 %1079
        %v1082 = vadd.f32 %v1072, %v1080
        %1084 = vset.pattern.permute.xlu0 0
        %1085 = vperm.xlu0 %1084, %v1070
        %v1086 = vpop.permute.xlu0 %1085
        %v1088 = vmul.f32 %v1082, %v1086
        %v1089 = vtanh.pop %v1088
        %1091 = vrot.lane.b32.xlu0 %v1089, 32
        %v1092 = vpop.permute.xlu0 %1091
        %v1094 = vmul.f32 %v1060, %v1092
        %v1095 = vmul.f32 %v1094, %v1086
        %v1096 = vmul.f32 %v1067, %v934
        %1098 = vrot.lane.b32.xlu0 %v1068, 32
        %v1099 = vpop.permute.xlu0 %1098
        %v1101 = vmul.f32 %v1067, %v1099
        %1103 = vrot.lane.b32.xlu0 %v1101, 32
        %v1104 = vpop.permute.xlu0 %1103
        %v1106 = vadd.f32 %v1096, %v1104
        %1108 = vset.pattern.permute.xlu0 0
        %1109 = vperm.xlu0 %1108, %v1071
        %v1110 = vpop.permute.xlu0 %1109
        %v1112 = vmul.f32 %v1106, %v1110
        %v1113 = vtanh.pop %v1112
        %1115 = vrot.lane.b32.xlu0 %v1113, 32
        %v1116 = vpop.permute.xlu0 %1115
        %v1118 = vmul.f32 %v1067, %v1116
        %v1119 = vmul.f32 %v1118, %v1110
        %1121 = vrot.lane.b32.xlu0 %v1095, 64
        %v1122 = vpop.permute.xlu0 %1121
        %s1124 = scalar_lea.vmem %s326, 24 [#allocation7]
        %1125 = vst.msk [vmem:[%s1124] sm:$0xff] %vm406, %v1122
        %1127 = vrot.lane.b32.xlu0 %v1119, 64
        %v1128 = vpop.permute.xlu0 %1127
        %1130 = vst.msk [vmem:[%s333] sm:$0xff] %vm406, %v1128
        %v1131 = vpack.c.bf16 %v1095, %v1095
        %v1132 = vpack.c.bf16 %v1119, %v1119
        %v1134 = vunpack.c.l.b16 %v1131
        %v1135 = vpack.c.b16 %v1134, %v1134
        %1136 = vrot.lane.b32.xlu0 %v1135, 64
        %v1137 = vpop.permute.xlu0 %1136
        %vm1139 = vcmask 257024
        %1140 = vst.msk [vmem:[#allocation2] sm:$0xf] %vm1139, %v1137
        %v1142 = vunpack.c.l.b16 %v1132
        %v1143 = vpack.c.b16 %v1142, %v1142
        %1144 = vrot.lane.b32.xlu0 %v1143, 64
        %v1145 = vpop.permute.xlu0 %1144
        %1147 = vst.msk [vmem:[%s388] sm:$0xf] %vm1139, %v1145
        %1149 = vrot.lane.b32.xlu0 %v1088, 96
        %v1150 = vpop.permute.xlu0 %1149
        %1152 = vst.msk [vmem:[#allocation3] sm:$0xff] %vm406, %v1150
        %1154 = vrot.lane.b32.xlu0 %v1112, 96
        %v1155 = vpop.permute.xlu0 %1154
        %1157 = vst.msk [vmem:[%s390] sm:$0xff] %vm406, %v1155
        %s1158 = sand.u32 %s162, 1
        %s1159 = scalar_lea.sflag [#allocation6], %s1158
        %s1160 = sand.u32 %s162, 1
        %s1161 = smul.addr %s1160, 32
        %s1162 = scalar_lea.vmem [#allocation7], %s1161
        %s1163 = sand.u32 %s190, 1
        %s1164 = scalar_lea.sflag [#allocation9], %s1163
        %s1165 = sand.u32 %s190, 1
        %s1166 = smul.addr %s1165, 32
        %s1167 = scalar_lea.vmem [#allocation8], %s1166
        // Predicated region
        $region49: #{tpu_custom_call.1} parent=39 // pred_check
          %p1168 = pneg %p172
        $region50: #{tpu_custom_call.1} parent=39 // pred_check_branch
          %1170 = sbr.rel (%p1168) target = $region52
        $region51: #{tpu_custom_call.1} parent=39 // pred_region
          %s1171 = smul.u32 4, %s25
          %s1173 = ssub.s32 512, 512
          %1174 = vsyncadd %s1159, %s1173
          %s1175 = smul.addr %s1171, 128
          %s1176 = scalar_lea.hbm %s5, %s1175
          %s1177 = sshll.u32 %s1162, 4
          %s1178 = int_to_ptr.vmem [resolvable:$true] %s1177
          %1183 = dma.vmem_to_hbm [thread:$0]  %s1178, 512, %s1176, %s1159, 128, 128, 8
        $region52: #{tpu_custom_call.1} parent=39 // pred_fallthru
          _
        // Predicated region
        $region53: #{tpu_custom_call.1} parent=39 // pred_check
          %p1184 = pneg %p200
        $region54: #{tpu_custom_call.1} parent=39 // pred_check_branch
          %1186 = sbr.rel (%p1184) target = $region56
        $region55: #{tpu_custom_call.1} parent=39 // pred_region
          %s1187 = ssub.s32 2, %s25
          %s1188 = smul.u32 4, %s1187
          %s1190 = ssub.s32 512, 512
          %1191 = vsyncadd %s1164, %s1190
          %s1192 = smul.addr %s1188, 128
          %s1193 = scalar_lea.hbm %s6, %s1192
          %s1194 = sshll.u32 %s1167, 4
          %s1195 = int_to_ptr.vmem [resolvable:$true] %s1194
          %1200 = dma.vmem_to_hbm [thread:$0]  %s1195, 512, %s1193, %s1164, 128, 128, 8
        $region56: #{tpu_custom_call.1} parent=39 // pred_fallthru
          _
      $region40: #{tpu_custom_call.1} parent=5 // pred_fallthru
        _
      %p1201 = scmp.le.s32.totalorder 2, %s20
      // Predicated region
      $region57: #{tpu_custom_call.1} parent=5 // pred_check
        %p1202 = pneg %p1201
      $region58: #{tpu_custom_call.1} parent=5 // pred_check_branch
        %1204 = sbr.rel (%p1202) target = $region60
      $region59: #{tpu_custom_call.1} parent=5 // pred_region
        %s1205 = ssub.s32 %s20, 2
        // Predicated region
        $region61: #{tpu_custom_call.1} parent=59 // pred_check
          %p1206 = pneg %p178
        $region62: #{tpu_custom_call.1} parent=59 // pred_check_branch
          %1208 = sbr.rel (%p1206) target = $region64
        $region63: #{tpu_custom_call.1} parent=59 // pred_region
          %s1209 = sand.u32 %s163, 1
          %s1210 = scalar_lea.sflag [#allocation6], %s1209
          %s1211 = sand.u32 %s163, 1
          %s1212 = smul.addr %s1211, 32
          %s1213 = scalar_lea.vmem [#allocation7], %s1212
          %1214 = dma.done %s1210, 512
        $region64: #{tpu_custom_call.1} parent=59 // pred_fallthru
          _
        // Predicated region
        $region65: #{tpu_custom_call.1} parent=59 // pred_check
          %p1215 = pneg %p206
        $region66: #{tpu_custom_call.1} parent=59 // pred_check_branch
          %1217 = sbr.rel (%p1215) target = $region68
        $region67: #{tpu_custom_call.1} parent=59 // pred_region
          %s1218 = sand.u32 %s191, 1
          %s1219 = scalar_lea.sflag [#allocation9], %s1218
          %s1220 = sand.u32 %s191, 1
          %s1221 = smul.addr %s1220, 32
          %s1222 = scalar_lea.vmem [#allocation8], %s1221
          %1223 = dma.done %s1219, 512
        $region68: #{tpu_custom_call.1} parent=59 // pred_fallthru
          _
      $region60: #{tpu_custom_call.1} parent=5 // pred_fallthru
        _
    $region6: #{tpu_custom_call.1} parent=1 // loop_footer
      %s24 = sadd.s32 1, %s20
    $region7: #{tpu_custom_call.1} parent=1 // loop_footer_branch
      %19 = sbr.rel target = $region3
    $region8: #{tpu_custom_call.1} parent=1 // loop_exit
      _
    %1224 = vsyncpa [#allocation5], 1
    %s1225 = scalar_lea.sflag [#allocation5], 1
    %1226 = vsyncpa %s1225, 1
    %1227 = vsyncpa [#allocation6], 1
    %s1228 = scalar_lea.sflag [#allocation6], 1
    %1229 = vsyncpa %s1228, 1
    %1230 = vsyncpa [#allocation9], 1
    %s1231 = scalar_lea.sflag [#allocation9], 1
    %1232 = vsyncpa %s1231, 1

</llo_original>
